<compile_context>
chip_gen: v5e
topology: v5e:2x2
jax: 0.10.0
libtpu: 0.0.40
codegen_flags: <defaults>
</compile_context>

<pallas_src>
import jax
import jax.numpy as jnp
from jax.experimental import pallas as pl
from jax.experimental.pallas import tpu as pltpu

LAT_PAD = 128  # lane-dense packed latent slab width (mu | std | zero pad)


# ----------------------------- Pallas kernel -------------------------------
def gpvae_fwd_kernel(y_ref, eps_ref,
                     w1_ref, b1_ref, wmusig_ref, bmusig_ref,
                     wd1_ref, bd1_ref, wd2_ref, bd2_ref,
                     lat_ref, rec_ref):
    f32 = jnp.float32
    bf16 = jnp.bfloat16
    L = bmusig_ref.shape[1] // 2

    y = y_ref[...]                                              # (TM, D) bf16

    # encoder layer 1: bf16 MXU matmul, f32 accumulation
    h = jnp.tanh(jnp.dot(y, w1_ref[...], preferred_element_type=f32)
                 + b1_ref[...])                                 # (TM, HID) f32

    # fused mu|sigma head: ONE MXU dot, then split columns
    head = (jnp.dot(h.astype(bf16), wmusig_ref[...], preferred_element_type=f32)
            + bmusig_ref[...])                                  # (TM, 2L) f32
    mu = head[:, :L]
    std = jax.nn.softplus(head[:, L:])

    # reparameterization:  z = mu + std * eps   (eps supplied)
    z = mu + std * eps_ref[...]                                 # (TM, L) f32

    # decoder layer 1: K = L = 4 contraction as VPU broadcast-FMAs (skip MXU round trip)
    wd1 = wd1_ref[...]                                          # (L, HID) f32
    hd_pre = jnp.broadcast_to(bd1_ref[...], (z.shape[0], wd1.shape[1]))
    for k in range(wd1.shape[0]):                               # static unroll, L terms
        hd_pre = hd_pre + z[:, k:k + 1] * wd1[k:k + 1, :]
    hd = jnp.tanh(hd_pre)                                       # (TM, HID) f32

    # decoder output head (bernoulli -> sigmoid), bf16 MXU matmul, f32 accumulation
    rec = jax.nn.sigmoid(jnp.dot(hd.astype(bf16), wd2_ref[...],
                                 preferred_element_type=f32) + bd2_ref[...])

    # lane-dense packed latent output slab: [mu | std | zeros], width 128
    lat_ref[...] = jnp.zeros_like(lat_ref)
    lat_ref[:, 0:L] = mu
    lat_ref[:, L:2 * L] = std
    rec_ref[...] = rec.astype(rec_ref.dtype)


# ------------------------------- wrapper ------------------------------------
def gpvae_forward(y_rows, eps_rows, params, *, tm=128):
    """y_rows: (N, D) f32, eps_rows: (N, L) f32. Returns (means, stds, recon)."""
    (w1, b1, wmu, bmu, wsig, bsig, wd1, bd1, wd2, bd2) = params
    N, D = y_rows.shape
    L = wmu.shape[1]
    HID = w1.shape[1]
    assert N % tm == 0 and 2 * L <= LAT_PAD

    bf16 = jnp.bfloat16
    # host-side prep: bf16 matmul operands (halve DMA bytes), fused mu|sigma head
    y_bf = y_rows.astype(bf16)
    w1_bf = w1.astype(bf16)
    wmusig = jnp.concatenate([wmu, wsig], axis=1).astype(bf16)    # (HID, 2L)
    bmusig = jnp.concatenate([bmu, bsig], axis=1)                 # (1, 2L) f32
    wd2_bf = wd2.astype(bf16)

    full = lambda shape: pl.BlockSpec(shape, lambda i: (0, 0))
    rows = lambda cols: pl.BlockSpec((tm, cols), lambda i: (i, 0))

    grid_spec = pltpu.PrefetchScalarGridSpec(
        num_scalar_prefetch=0,
        grid=(N // tm,),
        in_specs=[
            rows(D),                                   # y (bf16)
            rows(L),                                   # eps (f32, tiny)
            full((D, HID)), full((1, HID)),            # W1 (bf16), b1
            full((HID, 2 * L)), full((1, 2 * L)),      # Wmu|Wsig (bf16), bmu|bsig
            full((L, HID)), full((1, HID)),            # Wd1 (f32, VPU path), bd1
            full((HID, D)), full((1, D)),              # Wd2 (bf16), bd2
        ],
        out_specs=[rows(LAT_PAD), rows(D)],
    )

    lat, rec = pl.pallas_call(
        gpvae_fwd_kernel,
        grid_spec=grid_spec,
        out_shape=(
            jax.ShapeDtypeStruct((N, LAT_PAD), jnp.float32),   # packed [mu | std | 0]
            jax.ShapeDtypeStruct((N, D), jnp.float32),         # recon
        ),
        compiler_params=pltpu.CompilerParams(
            dimension_semantics=("parallel",)),
    )(y_bf, eps_rows, w1_bf, b1, wmusig, bmusig, wd1, bd1, wd2_bf, bd2)

    means = lat[:, :L]
    stds = lat[:, L:2 * L]
    return means, stds, rec


# ------------------------------ reference ----------------------------------
def gpvae_forward_ref(y_rows, eps_rows, params):
    """Pure-JAX reference mirroring the kernel's bf16 matmul-operand casts."""
    (w1, b1, wmu, bmu, wsig, bsig, wd1, bd1, wd2, bd2) = params
    bf16 = jnp.bfloat16
    f32 = jnp.float32
    L = wmu.shape[1]

    y = y_rows.astype(bf16)
    h = jnp.tanh(jnp.dot(y, w1.astype(bf16), preferred_element_type=f32) + b1)
    wmusig = jnp.concatenate([wmu, wsig], axis=1).astype(bf16)
    bmusig = jnp.concatenate([bmu, bsig], axis=1)
    head = jnp.dot(h.astype(bf16), wmusig, preferred_element_type=f32) + bmusig
    mu = head[:, :L]
    std = jax.nn.softplus(head[:, L:])
    z = mu + std * eps_rows
    hd = jnp.tanh((z[:, :, None] * wd1[None, :, :]).sum(axis=1) + bd1)  # exact f32
    rec = jax.nn.sigmoid(jnp.dot(hd.astype(bf16), wd2.astype(bf16),
                                 preferred_element_type=f32) + bd2)
    return mu, std, rec


# --------------------------------- main -------------------------------------
if __name__ == "__main__":
    # small shapes implied by the forward: batch of video frames -> latents
    B, n = 2, 128          # batch series, timesteps per series (N = 256 rows)
    C, Himg, Wimg = 1, 16, 16
    D = C * Himg * Wimg    # 256 flattened pixels (lane-dense feature axis)
    HID = 128              # hidden width = full vreg lane width / MXU column
    L = 4                  # gp.output_dims (latent dims)

    key = jax.random.PRNGKey(0)
    keys = jax.random.split(key, 8)

    # deterministic synthetic parameters (no checkpoint loading)
    scale = 0.1
    w1   = scale * jax.random.normal(keys[0], (D, HID), jnp.float32)
    b1   = jnp.zeros((1, HID), jnp.float32)
    wmu  = scale * jax.random.normal(keys[1], (HID, L), jnp.float32)
    bmu  = jnp.zeros((1, L), jnp.float32)
    wsig = scale * jax.random.normal(keys[2], (HID, L), jnp.float32)
    bsig = jnp.zeros((1, L), jnp.float32)
    wd1  = scale * jax.random.normal(keys[3], (L, HID), jnp.float32)
    bd1  = jnp.zeros((1, HID), jnp.float32)
    wd2  = scale * jax.random.normal(keys[4], (HID, D), jnp.float32)
    bd2  = jnp.zeros((1, D), jnp.float32)
    params = (w1, b1, wmu, bmu, wsig, bsig, wd1, bd1, wd2, bd2)

    # inputs: NCHW frames per timestep, flattened to lane-dense rows
    y_batch = jax.random.uniform(keys[5], (B, n, C, Himg, Wimg), jnp.float32)
    y_rows = y_batch.reshape(B * n, D)

    # eps ~ randn_like(means) in the PyTorch forward; supplied deterministically
    # TODO(synk): in-module torch.randn_like is replaced by an explicit eps input.
    eps_rows = jax.random.normal(keys[6], (B * n, L), jnp.float32)

    means, stds, recon = gpvae_forward(y_rows, eps_rows, params, tm=128)
    jax.block_until_ready((means, stds, recon))

    # correctness check vs pure-JAX reference (same bf16 matmul operands)
    mu_r, std_r, rec_r = gpvae_forward_ref(y_rows, eps_rows, params)
    assert jnp.allclose(means, mu_r, atol=3e-3, rtol=3e-3)
    assert jnp.allclose(stds, std_r, atol=3e-3, rtol=3e-3)
    assert jnp.allclose(recon, rec_r, atol=3e-3, rtol=3e-3)

    # reshape recon back to NCHW video frames for shape parity with the module
    recon_imgs = recon.reshape(B, n, C, Himg, Wimg)
    assert means.shape == (B * n, L) and stds.shape == (B * n, L)
    assert recon_imgs.shape == y_batch.shape

    print("KERNEL_OK")
</pallas_src>

<mosaic_0001>
module attributes {stable_mosaic.version = 11 : i64} {
  func.func @gpvae_fwd_kernel(%arg0: i32, %arg1: memref<128x256xbf16, #tpu.memory_space<vmem>>, %arg2: memref<128x4xf32, #tpu.memory_space<vmem>>, %arg3: memref<256x128xbf16, #tpu.memory_space<vmem>>, %arg4: memref<1x128xf32, #tpu.memory_space<vmem>>, %arg5: memref<128x8xbf16, #tpu.memory_space<vmem>>, %arg6: memref<1x8xf32, #tpu.memory_space<vmem>>, %arg7: memref<4x128xf32, #tpu.memory_space<vmem>>, %arg8: memref<1x128xf32, #tpu.memory_space<vmem>>, %arg9: memref<128x256xbf16, #tpu.memory_space<vmem>>, %arg10: memref<1x256xf32, #tpu.memory_space<vmem>>, %arg11: memref<128x128xf32, #tpu.memory_space<vmem>>, %arg12: memref<128x256xf32, #tpu.memory_space<vmem>>) attributes {dimension_semantics = [#tpu.dimension_semantics<parallel>], iteration_bounds = array<i64: 2>, scalar_prefetch = 0 : i64, scratch_operands = 0 : i64, tpu.core_type = #tpu.core_type<tc>, window_params = [{transform_indices = @transform_0, window_bounds = array<i64: 128, 256>}, {transform_indices = @transform_1, window_bounds = array<i64: 128, 4>}, {pipeline_mode = #tpu.pipeline_mode<synchronous>, transform_indices = @transform_2, window_bounds = array<i64: 256, 128>}, {pipeline_mode = #tpu.pipeline_mode<synchronous>, transform_indices = @transform_3, window_bounds = array<i64: 1, 128>}, {pipeline_mode = #tpu.pipeline_mode<synchronous>, transform_indices = @transform_4, window_bounds = array<i64: 128, 8>}, {pipeline_mode = #tpu.pipeline_mode<synchronous>, transform_indices = @transform_5, window_bounds = array<i64: 1, 8>}, {pipeline_mode = #tpu.pipeline_mode<synchronous>, transform_indices = @transform_6, window_bounds = array<i64: 4, 128>}, {pipeline_mode = #tpu.pipeline_mode<synchronous>, transform_indices = @transform_7, window_bounds = array<i64: 1, 128>}, {pipeline_mode = #tpu.pipeline_mode<synchronous>, transform_indices = @transform_8, window_bounds = array<i64: 128, 256>}, {pipeline_mode = #tpu.pipeline_mode<synchronous>, transform_indices = @transform_9, window_bounds = array<i64: 1, 256>}, {transform_indices = @transform_10, window_bounds = array<i64: 128, 128>}, {transform_indices = @transform_11, window_bounds = array<i64: 128, 256>}]} {
    %c0 = arith.constant 0 : index
    %c0_0 = arith.constant 0 : index
    %0 = vector.load %arg1[%c0, %c0_0] : memref<128x256xbf16, #tpu.memory_space<vmem>>, vector<128x256xbf16>
    %c0_1 = arith.constant 0 : index
    %c0_2 = arith.constant 0 : index
    %1 = vector.load %arg3[%c0_1, %c0_2] : memref<256x128xbf16, #tpu.memory_space<vmem>>, vector<256x128xbf16>
    %cst = arith.constant dense<0.000000e+00> : vector<128x128xf32>
    %2 = tpu.matmul %0, %1, %cst {dimension_numbers = #tpu.dot_dimension_numbers<[1], [0], [0], [1], [0, 0, 1, 1], [], []>} : vector<128x256xbf16>, vector<256x128xbf16>, vector<128x128xf32> -> vector<128x128xf32>
    %c0_3 = arith.constant 0 : index
    %c0_4 = arith.constant 0 : index
    %3 = vector.load %arg4[%c0_3, %c0_4] : memref<1x128xf32, #tpu.memory_space<vmem>>, vector<1x128xf32>
    %4 = vector.broadcast %3 : vector<1x128xf32> to vector<128x128xf32>
    %5 = arith.addf %2, %4 : vector<128x128xf32>
    %6 = math.tanh %5 : vector<128x128xf32>
    %7 = arith.truncf %6 : vector<128x128xf32> to vector<128x128xbf16>
    %c0_5 = arith.constant 0 : index
    %c0_6 = arith.constant 0 : index
    %8 = vector.load %arg5[%c0_5, %c0_6] : memref<128x8xbf16, #tpu.memory_space<vmem>>, vector<128x8xbf16>
    %cst_7 = arith.constant dense<0.000000e+00> : vector<128x8xf32>
    %9 = tpu.matmul %7, %8, %cst_7 {dimension_numbers = #tpu.dot_dimension_numbers<[1], [0], [0], [1], [0, 0, 1, 1], [], []>} : vector<128x128xbf16>, vector<128x8xbf16>, vector<128x8xf32> -> vector<128x8xf32>
    %c0_8 = arith.constant 0 : index
    %c0_9 = arith.constant 0 : index
    %10 = vector.load %arg6[%c0_8, %c0_9] : memref<1x8xf32, #tpu.memory_space<vmem>>, vector<1x8xf32>
    %11 = vector.broadcast %10 : vector<1x8xf32> to vector<128x8xf32>
    %12 = arith.addf %9, %11 : vector<128x8xf32>
    %13 = vector.extract_strided_slice %12 {offsets = [0, 0], sizes = [128, 4], strides = [1, 1]} : vector<128x8xf32> to vector<128x4xf32>
    %14 = vector.extract_strided_slice %12 {offsets = [0, 4], sizes = [128, 4], strides = [1, 1]} : vector<128x8xf32> to vector<128x4xf32>
    %cst_10 = arith.constant 0.000000e+00 : f32
    %15 = vector.broadcast %cst_10 : f32 to vector<128x4xf32>
    %16 = arith.maximumf %14, %15 : vector<128x4xf32>
    %17 = vector.broadcast %cst_10 : f32 to vector<128x4xf32>
    %18 = arith.subf %14, %17 : vector<128x4xf32>
    %19 = arith.cmpf one, %18, %18 : vector<128x4xf32>
    %20 = vector.broadcast %cst_10 : f32 to vector<128x4xf32>
    %21 = arith.addf %14, %20 : vector<128x4xf32>
    %22 = math.absf %18 : vector<128x4xf32>
    %cst_11 = arith.constant 0.000000e+00 : f32
    %23 = vector.broadcast %cst_11 : f32 to vector<128x4xf32>
    %24 = arith.subf %23, %22 : vector<128x4xf32>
    %25 = math.exp %24 : vector<128x4xf32>
    %26 = math.log1p %25 : vector<128x4xf32>
    %27 = arith.addf %16, %26 : vector<128x4xf32>
    %28 = arith.select %19, %21, %27 : vector<128x4xi1>, vector<128x4xf32>
    %c0_12 = arith.constant 0 : index
    %c0_13 = arith.constant 0 : index
    %29 = vector.load %arg2[%c0_12, %c0_13] : memref<128x4xf32, #tpu.memory_space<vmem>>, vector<128x4xf32>
    %30 = arith.mulf %28, %29 : vector<128x4xf32>
    %31 = arith.addf %13, %30 : vector<128x4xf32>
    %c0_14 = arith.constant 0 : index
    %c0_15 = arith.constant 0 : index
    %32 = vector.load %arg7[%c0_14, %c0_15] : memref<4x128xf32, #tpu.memory_space<vmem>>, vector<4x128xf32>
    %c0_16 = arith.constant 0 : index
    %c0_17 = arith.constant 0 : index
    %33 = vector.load %arg8[%c0_16, %c0_17] : memref<1x128xf32, #tpu.memory_space<vmem>>, vector<1x128xf32>
    %34 = vector.shape_cast %33 : vector<1x128xf32> to vector<1x128xf32>
    %35 = vector.broadcast %34 : vector<1x128xf32> to vector<128x128xf32>
    %36 = vector.extract_strided_slice %31 {offsets = [0, 0], sizes = [128, 1], strides = [1, 1]} : vector<128x4xf32> to vector<128x1xf32>
    %37 = vector.extract_strided_slice %32 {offsets = [0, 0], sizes = [1, 128], strides = [1, 1]} : vector<4x128xf32> to vector<1x128xf32>
    %38 = vector.broadcast %36 : vector<128x1xf32> to vector<128x128xf32>
    %39 = vector.broadcast %37 : vector<1x128xf32> to vector<128x128xf32>
    %40 = arith.mulf %38, %39 : vector<128x128xf32>
    %41 = arith.addf %35, %40 : vector<128x128xf32>
    %42 = vector.extract_strided_slice %31 {offsets = [0, 1], sizes = [128, 1], strides = [1, 1]} : vector<128x4xf32> to vector<128x1xf32>
    %43 = vector.extract_strided_slice %32 {offsets = [1, 0], sizes = [1, 128], strides = [1, 1]} : vector<4x128xf32> to vector<1x128xf32>
    %44 = vector.broadcast %42 : vector<128x1xf32> to vector<128x128xf32>
    %45 = vector.broadcast %43 : vector<1x128xf32> to vector<128x128xf32>
    %46 = arith.mulf %44, %45 : vector<128x128xf32>
    %47 = arith.addf %41, %46 : vector<128x128xf32>
    %48 = vector.extract_strided_slice %31 {offsets = [0, 2], sizes = [128, 1], strides = [1, 1]} : vector<128x4xf32> to vector<128x1xf32>
    %49 = vector.extract_strided_slice %32 {offsets = [2, 0], sizes = [1, 128], strides = [1, 1]} : vector<4x128xf32> to vector<1x128xf32>
    %50 = vector.broadcast %48 : vector<128x1xf32> to vector<128x128xf32>
    %51 = vector.broadcast %49 : vector<1x128xf32> to vector<128x128xf32>
    %52 = arith.mulf %50, %51 : vector<128x128xf32>
    %53 = arith.addf %47, %52 : vector<128x128xf32>
    %54 = vector.extract_strided_slice %31 {offsets = [0, 3], sizes = [128, 1], strides = [1, 1]} : vector<128x4xf32> to vector<128x1xf32>
    %55 = vector.extract_strided_slice %32 {offsets = [3, 0], sizes = [1, 128], strides = [1, 1]} : vector<4x128xf32> to vector<1x128xf32>
    %56 = vector.broadcast %54 : vector<128x1xf32> to vector<128x128xf32>
    %57 = vector.broadcast %55 : vector<1x128xf32> to vector<128x128xf32>
    %58 = arith.mulf %56, %57 : vector<128x128xf32>
    %59 = arith.addf %53, %58 : vector<128x128xf32>
    %60 = math.tanh %59 : vector<128x128xf32>
    %61 = arith.truncf %60 : vector<128x128xf32> to vector<128x128xbf16>
    %c0_18 = arith.constant 0 : index
    %c0_19 = arith.constant 0 : index
    %62 = vector.load %arg9[%c0_18, %c0_19] : memref<128x256xbf16, #tpu.memory_space<vmem>>, vector<128x256xbf16>
    %cst_20 = arith.constant dense<0.000000e+00> : vector<128x256xf32>
    %63 = tpu.matmul %61, %62, %cst_20 {dimension_numbers = #tpu.dot_dimension_numbers<[1], [0], [0], [1], [0, 0, 1, 1], [], []>} : vector<128x128xbf16>, vector<128x256xbf16>, vector<128x256xf32> -> vector<128x256xf32>
    %c0_21 = arith.constant 0 : index
    %c0_22 = arith.constant 0 : index
    %64 = vector.load %arg10[%c0_21, %c0_22] : memref<1x256xf32, #tpu.memory_space<vmem>>, vector<1x256xf32>
    %65 = vector.broadcast %64 : vector<1x256xf32> to vector<128x256xf32>
    %66 = arith.addf %63, %65 : vector<128x256xf32>
    %67 = arith.negf %66 : vector<128x256xf32>
    %68 = math.exp %67 : vector<128x256xf32>
    %cst_23 = arith.constant 1.000000e+00 : f32
    %69 = vector.broadcast %cst_23 : f32 to vector<128x256xf32>
    %70 = arith.addf %69, %68 : vector<128x256xf32>
    %71 = arith.divf %69, %70 : vector<128x256xf32>
    %cst_24 = arith.constant 0.000000e+00 : f32
    %72 = vector.broadcast %cst_24 : f32 to vector<128x128xf32>
    %c0_25 = arith.constant 0 : index
    %c0_26 = arith.constant 0 : index
    %73 = vector.load %arg11[%c0_25, %c0_26] : memref<128x128xf32, #tpu.memory_space<vmem>>, vector<128x128xf32>
    tpu.vector_store %arg11[%c0_25, %c0_26], %72 {strides = array<i32>} : memref<128x128xf32, #tpu.memory_space<vmem>>, vector<128x128xf32>,
    %c0_27 = arith.constant 0 : index
    %c0_28 = arith.constant 0 : index
    %74 = vector.load %arg11[%c0_27, %c0_28] : memref<128x128xf32, #tpu.memory_space<vmem>>, vector<128x4xf32>
    tpu.vector_store %arg11[%c0_27, %c0_28], %13 {strides = array<i32>} : memref<128x128xf32, #tpu.memory_space<vmem>>, vector<128x4xf32>,
    %c0_29 = arith.constant 0 : index
    %c4 = arith.constant 4 : index
    %75 = vector.load %arg11[%c0_29, %c4] : memref<128x128xf32, #tpu.memory_space<vmem>>, vector<128x4xf32>
    tpu.vector_store %arg11[%c0_29, %c4], %28 {strides = array<i32>} : memref<128x128xf32, #tpu.memory_space<vmem>>, vector<128x4xf32>,
    %c0_30 = arith.constant 0 : index
    %c0_31 = arith.constant 0 : index
    %76 = vector.load %arg12[%c0_30, %c0_31] : memref<128x256xf32, #tpu.memory_space<vmem>>, vector<128x256xf32>
    tpu.vector_store %arg12[%c0_30, %c0_31], %71 {strides = array<i32>} : memref<128x256xf32, #tpu.memory_space<vmem>>, vector<128x256xf32>,
    return
  }
  func.func @transform_0(%arg0: i32) -> (i32, i32) {
    %c0_i32 = arith.constant 0 : i32
    %c0_i32_0 = arith.constant 0 : i32
    return %arg0, %c0_i32 : i32, i32
  }
  func.func @transform_1(%arg0: i32) -> (i32, i32) {
    %c0_i32 = arith.constant 0 : i32
    %c0_i32_0 = arith.constant 0 : i32
    return %arg0, %c0_i32 : i32, i32
  }
  func.func @transform_2(%arg0: i32) -> (i32, i32) {
    %c0_i32 = arith.constant 0 : i32
    %c0_i32_0 = arith.constant 0 : i32
    %c0_i32_1 = arith.constant 0 : i32
    return %c0_i32, %c0_i32_0 : i32, i32
  }
  func.func @transform_3(%arg0: i32) -> (i32, i32) {
    %c0_i32 = arith.constant 0 : i32
    %c0_i32_0 = arith.constant 0 : i32
    %c0_i32_1 = arith.constant 0 : i32
    return %c0_i32, %c0_i32_0 : i32, i32
  }
  func.func @transform_4(%arg0: i32) -> (i32, i32) {
    %c0_i32 = arith.constant 0 : i32
    %c0_i32_0 = arith.constant 0 : i32
    %c0_i32_1 = arith.constant 0 : i32
    return %c0_i32, %c0_i32_0 : i32, i32
  }
  func.func @transform_5(%arg0: i32) -> (i32, i32) {
    %c0_i32 = arith.constant 0 : i32
    %c0_i32_0 = arith.constant 0 : i32
    %c0_i32_1 = arith.constant 0 : i32
    return %c0_i32, %c0_i32_0 : i32, i32
  }
  func.func @transform_6(%arg0: i32) -> (i32, i32) {
    %c0_i32 = arith.constant 0 : i32
    %c0_i32_0 = arith.constant 0 : i32
    %c0_i32_1 = arith.constant 0 : i32
    return %c0_i32, %c0_i32_0 : i32, i32
  }
  func.func @transform_7(%arg0: i32) -> (i32, i32) {
    %c0_i32 = arith.constant 0 : i32
    %c0_i32_0 = arith.constant 0 : i32
    %c0_i32_1 = arith.constant 0 : i32
    return %c0_i32, %c0_i32_0 : i32, i32
  }
  func.func @transform_8(%arg0: i32) -> (i32, i32) {
    %c0_i32 = arith.constant 0 : i32
    %c0_i32_0 = arith.constant 0 : i32
    %c0_i32_1 = arith.constant 0 : i32
    return %c0_i32, %c0_i32_0 : i32, i32
  }
  func.func @transform_9(%arg0: i32) -> (i32, i32) {
    %c0_i32 = arith.constant 0 : i32
    %c0_i32_0 = arith.constant 0 : i32
    %c0_i32_1 = arith.constant 0 : i32
    return %c0_i32, %c0_i32_0 : i32, i32
  }
  func.func @transform_10(%arg0: i32) -> (i32, i32) {
    %c0_i32 = arith.constant 0 : i32
    %c0_i32_0 = arith.constant 0 : i32
    return %arg0, %c0_i32 : i32, i32
  }
  func.func @transform_11(%arg0: i32) -> (i32, i32) {
    %c0_i32 = arith.constant 0 : i32
    %c0_i32_0 = arith.constant 0 : i32
    return %arg0, %c0_i32 : i32, i32
  }
}

</mosaic_0001>

<llo_original>
// kernel: tpu_custom_call.1
$region0: #{tpu_custom_call.1}
  #allocation0 [shape = 'u32[]', space=smem, size = 0x4, offset = 0x4, fixed_abs, tag = 'smem constant byte address 0x4 - core index']
  #allocation1 [shape = 'u32[72,128]{1,0:T(1,128)}', space=vmem, size = 0x9000, scoped, tag = 'internal scratch']
  %s0 = inlined_call_operand.vmem [shape: bf16[256,256], index: 0, kind: input, shape index: {}]
  %s1 = inlined_call_operand.vmem [shape: f32[256,4], index: 1, kind: input, shape index: {}]
  %s2 = inlined_call_operand.hbm [shape: bf16[256,128], index: 2, kind: input, shape index: {}]
  %s3 = inlined_call_operand.vmem [shape: f32[1,128], index: 3, kind: input, shape index: {}]
  %s4 = inlined_call_operand.vmem [shape: bf16[128,8], index: 4, kind: input, shape index: {}]
  %s5 = inlined_call_operand.vmem [shape: f32[1,8], index: 5, kind: input, shape index: {}]
  %s6 = inlined_call_operand.vmem [shape: f32[4,128], index: 6, kind: input, shape index: {}]
  %s7 = inlined_call_operand.vmem [shape: f32[1,128], index: 7, kind: input, shape index: {}]
  %s8 = inlined_call_operand.hbm [shape: bf16[128,256], index: 8, kind: input, shape index: {}]
  %s9 = inlined_call_operand.vmem [shape: f32[1,256], index: 9, kind: input, shape index: {}]
  %s10 = inlined_call_operand.hbm [shape: f32[256,128], index: 10, kind: output, shape index: {0}]
  %s11 = inlined_call_operand.hbm [shape: f32[256,256], index: 11, kind: output, shape index: {1}]
  %12 = xla_tuple %s10, %s11
  %s13 = sld [smem:[#allocation0]]
  $region89: #{tpu_custom_call.1} parent=0
    _
  %s15 = ssub.s32 1, %s13
  %s16 = scalar_select 0, %s15, %s13
  $region1: #{tpu_custom_call.1} parent=0
    #allocation2 [shape = 'u8[65536]{0}', space=vmem, size = 0x10000, scoped, tag = 'input window, operand 2, single buffered']
    #allocation3 [shape = 's32[2]{0}', space=sflag, size = 0x8, scoped, tag = 'scoped memory for tpu_custom_call.1']
    #allocation4 [shape = 's32[2]{0}', space=sflag, size = 0x8, scoped, tag = 'scoped memory for tpu_custom_call.1']
    #allocation5 [shape = 'u8[65536]{0}', space=vmem, size = 0x10000, scoped, tag = 'input window, operand 8, single buffered']
    #allocation6 [shape = 's32[1]{0}', space=sflag, size = 0x4, scoped, tag = 'scoped memory for tpu_custom_call.1']
    #allocation7 [shape = 'u8[131072]{0}', space=vmem, size = 0x20000, scoped, tag = 'output window, operand 0']
    #allocation8 [shape = 'u8[262144]{0}', space=vmem, size = 0x40000, scoped, tag = 'output window, operand 1']
    #allocation9 [shape = 's32[2]{0}', space=sflag, size = 0x8, scoped, tag = 'scoped memory for tpu_custom_call.1']
    %17 = vsyncpa [#allocation3], 0
    %18 = vsyncpa [#allocation6], 0
    %19 = vsyncpa [#allocation4], 0
    %s20 = scalar_lea.sflag [#allocation4], 1
    %21 = vsyncpa %s20, 0
    %22 = vsyncpa [#allocation9], 0
    %s23 = scalar_lea.sflag [#allocation9], 1
    %24 = vsyncpa %s23, 0
    loop: start=0, step=1, limit=4
    $region2: #{tpu_custom_call.1} parent=1 // loop_pre_header
      _
    $region3: #{tpu_custom_call.1} parent=1 // loop_header
      %s26 = sphi 0, %s30
      %p27 = scmp.ge.s32.totalorder %s26, 4
      %s36 = sphi 0, %s38
      %s39 = sphi 0, %s36
      %s40 = sphi 0, %s39
      %s56 = sphi 0, %s40
      %s62 = sphi 0, %s64
      %s65 = sphi 0, %s62
      %s66 = sphi 0, %s65
      %s82 = sphi 0, %s66
      %s86 = sphi 0, %s86
      %s88 = sphi 0, %s86
      %s89 = sphi 0, %s88
      %s103 = sphi 0, %s89
      %s107 = sphi 0, %s107
      %s109 = sphi 0, %s107
      %s110 = sphi 0, %s109
      %s124 = sphi 0, %s110
      %s128 = sphi 0, %s128
      %s130 = sphi 0, %s128
      %s131 = sphi 0, %s130
      %s145 = sphi 0, %s131
      %s149 = sphi 0, %s149
      %s151 = sphi 0, %s149
      %s152 = sphi 0, %s151
      %s166 = sphi 0, %s152
      %s170 = sphi 0, %s170
      %s172 = sphi 0, %s170
      %s173 = sphi 0, %s172
      %s187 = sphi 0, %s173
      %s191 = sphi 0, %s191
      %s193 = sphi 0, %s191
      %s194 = sphi 0, %s193
      %s208 = sphi 0, %s194
      %s212 = sphi 0, %s212
      %s214 = sphi 0, %s212
      %s215 = sphi 0, %s214
      %s229 = sphi 0, %s215
      %s233 = sphi 0, %s233
      %s235 = sphi 0, %s233
      %s236 = sphi 0, %s235
      %s250 = sphi 0, %s236
      %s256 = sphi 0, %s258
      %s259 = sphi 0, %s256
      %s260 = sphi 0, %s259
      %s276 = sphi 0, %s260
      %s282 = sphi 0, %s284
      %s285 = sphi 0, %s282
      %s286 = sphi 0, %s285
      %s302 = sphi 0, %s286
    $region4: #{tpu_custom_call.1} parent=1 // loop_header_branch
      %29 = sbr.rel (%p27) target = $region8
    $region5: #{tpu_custom_call.1} parent=1 // loop_body
      %s31 = ssub.s32 %s26, 1
      %s32 = ssub.s32 %s26, 2
      %s33 = sadd.s32 %s26, 1
      %s34 = ssub.s32 %s26, %s33
      %p35 = scmp.eq.s32.totalorder %s34, 0
      %s37 = sadd.s32 %s36, 1
      %s38 = scalar_select %p35, %s36, %s37
      %p41 = pneg %p35
      %p42 = scmp.eq.s32.totalorder %s26, 1
      %p43 = por %p41, %p42
      %p44 = scmp.ne.s32.totalorder %s36, %s39
      %p45 = scmp.eq.s32.totalorder %s26, 0
      %p46 = por %p44, %p45
      %p47 = scmp.ne.s32.totalorder %s36, %s39
      %p48 = scmp.eq.s32.totalorder %s31, 1
      %p49 = por %p47, %p48
      %p50 = scmp.ne.s32.totalorder %s39, %s40
      %p51 = scmp.eq.s32.totalorder %s31, 0
      %p52 = por %p50, %p51
      %p53 = scmp.ne.s32.totalorder %s39, %s40
      %p54 = scmp.eq.s32.totalorder %s32, 1
      %p55 = por %p53, %p54
      %p57 = scmp.ne.s32.totalorder %s40, %s56
      %p58 = scmp.eq.s32.totalorder %s32, 0
      %p59 = por %p57, %p58
      %s60 = ssub.s32 %s26, %s33
      %p61 = scmp.eq.s32.totalorder %s60, 0
      %s63 = sadd.s32 %s62, 1
      %s64 = scalar_select %p61, %s62, %s63
      %p67 = pneg %p61
      %p68 = scmp.eq.s32.totalorder %s26, 1
      %p69 = por %p67, %p68
      %p70 = scmp.ne.s32.totalorder %s62, %s65
      %p71 = scmp.eq.s32.totalorder %s26, 0
      %p72 = por %p70, %p71
      %p73 = scmp.ne.s32.totalorder %s62, %s65
      %p74 = scmp.eq.s32.totalorder %s31, 1
      %p75 = por %p73, %p74
      %p76 = scmp.ne.s32.totalorder %s65, %s66
      %p77 = scmp.eq.s32.totalorder %s31, 0
      %p78 = por %p76, %p77
      %p79 = scmp.ne.s32.totalorder %s65, %s66
      %p80 = scmp.eq.s32.totalorder %s32, 1
      %p81 = por %p79, %p80
      %p83 = scmp.ne.s32.totalorder %s66, %s82
      %p84 = scmp.eq.s32.totalorder %s32, 0
      %p85 = por %p83, %p84
      %s87 = sadd.s32 %s86, 1
      %p90 = scmp.eq.s32.totalorder %s26, 1
      %p91 = scmp.ne.s32.totalorder %s86, %s88
      %p92 = scmp.eq.s32.totalorder %s26, 0
      %p93 = por %p91, %p92
      %p94 = scmp.ne.s32.totalorder %s86, %s88
      %p95 = scmp.eq.s32.totalorder %s31, 1
      %p96 = por %p94, %p95
      %p97 = scmp.ne.s32.totalorder %s88, %s89
      %p98 = scmp.eq.s32.totalorder %s31, 0
      %p99 = por %p97, %p98
      %p100 = scmp.ne.s32.totalorder %s88, %s89
      %p101 = scmp.eq.s32.totalorder %s32, 1
      %p102 = por %p100, %p101
      %p104 = scmp.ne.s32.totalorder %s89, %s103
      %p105 = scmp.eq.s32.totalorder %s32, 0
      %p106 = por %p104, %p105
      %s108 = sadd.s32 %s107, 1
      %p111 = scmp.eq.s32.totalorder %s26, 1
      %p112 = scmp.ne.s32.totalorder %s107, %s109
      %p113 = scmp.eq.s32.totalorder %s26, 0
      %p114 = por %p112, %p113
      %p115 = scmp.ne.s32.totalorder %s107, %s109
      %p116 = scmp.eq.s32.totalorder %s31, 1
      %p117 = por %p115, %p116
      %p118 = scmp.ne.s32.totalorder %s109, %s110
      %p119 = scmp.eq.s32.totalorder %s31, 0
      %p120 = por %p118, %p119
      %p121 = scmp.ne.s32.totalorder %s109, %s110
      %p122 = scmp.eq.s32.totalorder %s32, 1
      %p123 = por %p121, %p122
      %p125 = scmp.ne.s32.totalorder %s110, %s124
      %p126 = scmp.eq.s32.totalorder %s32, 0
      %p127 = por %p125, %p126
      %s129 = sadd.s32 %s128, 1
      %p132 = scmp.eq.s32.totalorder %s26, 1
      %p133 = scmp.ne.s32.totalorder %s128, %s130
      %p134 = scmp.eq.s32.totalorder %s26, 0
      %p135 = por %p133, %p134
      %p136 = scmp.ne.s32.totalorder %s128, %s130
      %p137 = scmp.eq.s32.totalorder %s31, 1
      %p138 = por %p136, %p137
      %p139 = scmp.ne.s32.totalorder %s130, %s131
      %p140 = scmp.eq.s32.totalorder %s31, 0
      %p141 = por %p139, %p140
      %p142 = scmp.ne.s32.totalorder %s130, %s131
      %p143 = scmp.eq.s32.totalorder %s32, 1
      %p144 = por %p142, %p143
      %p146 = scmp.ne.s32.totalorder %s131, %s145
      %p147 = scmp.eq.s32.totalorder %s32, 0
      %p148 = por %p146, %p147
      %s150 = sadd.s32 %s149, 1
      %p153 = scmp.eq.s32.totalorder %s26, 1
      %p154 = scmp.ne.s32.totalorder %s149, %s151
      %p155 = scmp.eq.s32.totalorder %s26, 0
      %p156 = por %p154, %p155
      %p157 = scmp.ne.s32.totalorder %s149, %s151
      %p158 = scmp.eq.s32.totalorder %s31, 1
      %p159 = por %p157, %p158
      %p160 = scmp.ne.s32.totalorder %s151, %s152
      %p161 = scmp.eq.s32.totalorder %s31, 0
      %p162 = por %p160, %p161
      %p163 = scmp.ne.s32.totalorder %s151, %s152
      %p164 = scmp.eq.s32.totalorder %s32, 1
      %p165 = por %p163, %p164
      %p167 = scmp.ne.s32.totalorder %s152, %s166
      %p168 = scmp.eq.s32.totalorder %s32, 0
      %p169 = por %p167, %p168
      %s171 = sadd.s32 %s170, 1
      %p174 = scmp.eq.s32.totalorder %s26, 1
      %p175 = scmp.ne.s32.totalorder %s170, %s172
      %p176 = scmp.eq.s32.totalorder %s26, 0
      %p177 = por %p175, %p176
      %p178 = scmp.ne.s32.totalorder %s170, %s172
      %p179 = scmp.eq.s32.totalorder %s31, 1
      %p180 = por %p178, %p179
      %p181 = scmp.ne.s32.totalorder %s172, %s173
      %p182 = scmp.eq.s32.totalorder %s31, 0
      %p183 = por %p181, %p182
      %p184 = scmp.ne.s32.totalorder %s172, %s173
      %p185 = scmp.eq.s32.totalorder %s32, 1
      %p186 = por %p184, %p185
      %p188 = scmp.ne.s32.totalorder %s173, %s187
      %p189 = scmp.eq.s32.totalorder %s32, 0
      %p190 = por %p188, %p189
      %s192 = sadd.s32 %s191, 1
      %p195 = scmp.eq.s32.totalorder %s26, 1
      %p196 = scmp.ne.s32.totalorder %s191, %s193
      %p197 = scmp.eq.s32.totalorder %s26, 0
      %p198 = por %p196, %p197
      %p199 = scmp.ne.s32.totalorder %s191, %s193
      %p200 = scmp.eq.s32.totalorder %s31, 1
      %p201 = por %p199, %p200
      %p202 = scmp.ne.s32.totalorder %s193, %s194
      %p203 = scmp.eq.s32.totalorder %s31, 0
      %p204 = por %p202, %p203
      %p205 = scmp.ne.s32.totalorder %s193, %s194
      %p206 = scmp.eq.s32.totalorder %s32, 1
      %p207 = por %p205, %p206
      %p209 = scmp.ne.s32.totalorder %s194, %s208
      %p210 = scmp.eq.s32.totalorder %s32, 0
      %p211 = por %p209, %p210
      %s213 = sadd.s32 %s212, 1
      %p216 = scmp.eq.s32.totalorder %s26, 1
      %p217 = scmp.ne.s32.totalorder %s212, %s214
      %p218 = scmp.eq.s32.totalorder %s26, 0
      %p219 = por %p217, %p218
      %p220 = scmp.ne.s32.totalorder %s212, %s214
      %p221 = scmp.eq.s32.totalorder %s31, 1
      %p222 = por %p220, %p221
      %p223 = scmp.ne.s32.totalorder %s214, %s215
      %p224 = scmp.eq.s32.totalorder %s31, 0
      %p225 = por %p223, %p224
      %p226 = scmp.ne.s32.totalorder %s214, %s215
      %p227 = scmp.eq.s32.totalorder %s32, 1
      %p228 = por %p226, %p227
      %p230 = scmp.ne.s32.totalorder %s215, %s229
      %p231 = scmp.eq.s32.totalorder %s32, 0
      %p232 = por %p230, %p231
      %s234 = sadd.s32 %s233, 1
      %p237 = scmp.eq.s32.totalorder %s26, 1
      %p238 = scmp.ne.s32.totalorder %s233, %s235
      %p239 = scmp.eq.s32.totalorder %s26, 0
      %p240 = por %p238, %p239
      %p241 = scmp.ne.s32.totalorder %s233, %s235
      %p242 = scmp.eq.s32.totalorder %s31, 1
      %p243 = por %p241, %p242
      %p244 = scmp.ne.s32.totalorder %s235, %s236
      %p245 = scmp.eq.s32.totalorder %s31, 0
      %p246 = por %p244, %p245
      %p247 = scmp.ne.s32.totalorder %s235, %s236
      %p248 = scmp.eq.s32.totalorder %s32, 1
      %p249 = por %p247, %p248
      %p251 = scmp.ne.s32.totalorder %s236, %s250
      %p252 = scmp.eq.s32.totalorder %s32, 0
      %p253 = por %p251, %p252
      %s254 = ssub.s32 %s26, %s33
      %p255 = scmp.eq.s32.totalorder %s254, 0
      %s257 = sadd.s32 %s256, 1
      %s258 = scalar_select %p255, %s256, %s257
      %p261 = pneg %p255
      %p262 = scmp.eq.s32.totalorder %s26, 1
      %p263 = por %p261, %p262
      %p264 = scmp.ne.s32.totalorder %s256, %s259
      %p265 = scmp.eq.s32.totalorder %s26, 0
      %p266 = por %p264, %p265
      %p267 = scmp.ne.s32.totalorder %s256, %s259
      %p268 = scmp.eq.s32.totalorder %s31, 1
      %p269 = por %p267, %p268
      %p270 = scmp.ne.s32.totalorder %s259, %s260
      %p271 = scmp.eq.s32.totalorder %s31, 0
      %p272 = por %p270, %p271
      %p273 = scmp.ne.s32.totalorder %s259, %s260
      %p274 = scmp.eq.s32.totalorder %s32, 1
      %p275 = por %p273, %p274
      %p277 = scmp.ne.s32.totalorder %s260, %s276
      %p278 = scmp.eq.s32.totalorder %s32, 0
      %p279 = por %p277, %p278
      %s280 = ssub.s32 %s26, %s33
      %p281 = scmp.eq.s32.totalorder %s280, 0
      %s283 = sadd.s32 %s282, 1
      %s284 = scalar_select %p281, %s282, %s283
      %p287 = pneg %p281
      %p288 = scmp.eq.s32.totalorder %s26, 1
      %p289 = por %p287, %p288
      %p290 = scmp.ne.s32.totalorder %s282, %s285
      %p291 = scmp.eq.s32.totalorder %s26, 0
      %p292 = por %p290, %p291
      %p293 = scmp.ne.s32.totalorder %s282, %s285
      %p294 = scmp.eq.s32.totalorder %s31, 1
      %p295 = por %p293, %p294
      %p296 = scmp.ne.s32.totalorder %s285, %s286
      %p297 = scmp.eq.s32.totalorder %s31, 0
      %p298 = por %p296, %p297
      %p299 = scmp.ne.s32.totalorder %s285, %s286
      %p300 = scmp.eq.s32.totalorder %s32, 1
      %p301 = por %p299, %p300
      %p303 = scmp.ne.s32.totalorder %s286, %s302
      %p304 = scmp.eq.s32.totalorder %s32, 0
      %p305 = por %p303, %p304
      %p306 = scmp.le.s32.totalorder 1, %s26
      %p307 = scmp.lt.s32.totalorder %s26, 3
      %p308 = pnand %p306, %p307
      %p309 = pneg %p308
      // Predicated region
      $region9: #{tpu_custom_call.1} parent=5 // pred_check
        _
      $region10: #{tpu_custom_call.1} parent=5 // pred_check_branch
        %311 = sbr.rel (%p308) target = $region12
      $region11: #{tpu_custom_call.1} parent=5 // pred_region
        %s312 = ssub.s32 %s26, 1
        // Predicated region
        $region13: #{tpu_custom_call.1} parent=11 // pred_check
          %p313 = pneg %p99
        $region14: #{tpu_custom_call.1} parent=11 // pred_check_branch
          %315 = sbr.rel (%p313) target = $region16
        $region15: #{tpu_custom_call.1} parent=11 // pred_region
          %317 = vsyncadd [#allocation3], 0
          %s318 = sshll.u32 %s2, 4
          %s319 = int_to_ptr.hbm [resolvable:$true] %s318
          %s320 = sshll.u32 [#allocation2], 4
          %s321 = int_to_ptr.vmem [resolvable:$true] %s320
          %326 = dma.hbm_to_vmem [thread:$0]  %s319, 2048, %s321, [#allocation3], 64, 64, 4
        $region16: #{tpu_custom_call.1} parent=11 // pred_fallthru
          _
        // Predicated region
        $region17: #{tpu_custom_call.1} parent=11 // pred_check
          %p327 = pneg %p120
        $region18: #{tpu_custom_call.1} parent=11 // pred_check_branch
          %329 = sbr.rel (%p327) target = $region20
        $region19: #{tpu_custom_call.1} parent=11 // pred_region
          _
        $region20: #{tpu_custom_call.1} parent=11 // pred_fallthru
          _
        // Predicated region
        $region21: #{tpu_custom_call.1} parent=11 // pred_check
          %p330 = pneg %p141
        $region22: #{tpu_custom_call.1} parent=11 // pred_check_branch
          %332 = sbr.rel (%p330) target = $region24
        $region23: #{tpu_custom_call.1} parent=11 // pred_region
          _
        $region24: #{tpu_custom_call.1} parent=11 // pred_fallthru
          _
        // Predicated region
        $region25: #{tpu_custom_call.1} parent=11 // pred_check
          %p333 = pneg %p162
        $region26: #{tpu_custom_call.1} parent=11 // pred_check_branch
          %335 = sbr.rel (%p333) target = $region28
        $region27: #{tpu_custom_call.1} parent=11 // pred_region
          _
        $region28: #{tpu_custom_call.1} parent=11 // pred_fallthru
          _
        // Predicated region
        $region29: #{tpu_custom_call.1} parent=11 // pred_check
          %p336 = pneg %p183
        $region30: #{tpu_custom_call.1} parent=11 // pred_check_branch
          %338 = sbr.rel (%p336) target = $region32
        $region31: #{tpu_custom_call.1} parent=11 // pred_region
          _
        $region32: #{tpu_custom_call.1} parent=11 // pred_fallthru
          _
        // Predicated region
        $region33: #{tpu_custom_call.1} parent=11 // pred_check
          %p339 = pneg %p204
        $region34: #{tpu_custom_call.1} parent=11 // pred_check_branch
          %341 = sbr.rel (%p339) target = $region36
        $region35: #{tpu_custom_call.1} parent=11 // pred_region
          _
        $region36: #{tpu_custom_call.1} parent=11 // pred_fallthru
          _
        // Predicated region
        $region37: #{tpu_custom_call.1} parent=11 // pred_check
          %p342 = pneg %p225
        $region38: #{tpu_custom_call.1} parent=11 // pred_check_branch
          %344 = sbr.rel (%p342) target = $region40
        $region39: #{tpu_custom_call.1} parent=11 // pred_region
          %346 = vsyncadd [#allocation6], 0
          %s347 = sshll.u32 %s8, 4
          %s348 = int_to_ptr.hbm [resolvable:$true] %s347
          %s349 = sshll.u32 [#allocation5], 4
          %s350 = int_to_ptr.vmem [resolvable:$true] %s349
          %355 = dma.hbm_to_vmem [thread:$0]  %s348, 2048, %s350, [#allocation6], 128, 128, 8
        $region40: #{tpu_custom_call.1} parent=11 // pred_fallthru
          _
        // Predicated region
        $region41: #{tpu_custom_call.1} parent=11 // pred_check
          %p356 = pneg %p246
        $region42: #{tpu_custom_call.1} parent=11 // pred_check_branch
          %358 = sbr.rel (%p356) target = $region44
        $region43: #{tpu_custom_call.1} parent=11 // pred_region
          _
        $region44: #{tpu_custom_call.1} parent=11 // pred_fallthru
          _
      $region12: #{tpu_custom_call.1} parent=5 // pred_fallthru
        _
      %p359 = scmp.lt.s32.totalorder %s26, 2
      // Predicated region
      $region45: #{tpu_custom_call.1} parent=5 // pred_check
        %p360 = pneg %p359
      $region46: #{tpu_custom_call.1} parent=5 // pred_check_branch
        %362 = sbr.rel (%p360) target = $region48
      $region47: #{tpu_custom_call.1} parent=5 // pred_region
        // Predicated region
        $region49: #{tpu_custom_call.1} parent=47 // pred_check
          %p363 = pneg %p46
        $region50: #{tpu_custom_call.1} parent=47 // pred_check_branch
          %365 = sbr.rel (%p363) target = $region52
        $region51: #{tpu_custom_call.1} parent=47 // pred_region
          %s366 = smul.u32 16, %s26
          %p367 = scmp.lt.s32.totalorder %s366, 31
          %s368 = scalar_select %p367, %s366, 31
          %s369 = smul.addr %s368, 2
          %s370 = smul.addr %s369, 4
          %s371 = scalar_lea.vmem %s0, %s370
          %s372 = smul.u32 16, %s26
        $region52: #{tpu_custom_call.1} parent=47 // pred_fallthru
          _
        // Predicated region
        $region53: #{tpu_custom_call.1} parent=47 // pred_check
          %p373 = pneg %p72
        $region54: #{tpu_custom_call.1} parent=47 // pred_check_branch
          %375 = sbr.rel (%p373) target = $region56
        $region55: #{tpu_custom_call.1} parent=47 // pred_region
          %s376 = smul.u32 16, %s26
          %p377 = scmp.lt.s32.totalorder %s376, 31
          %s378 = scalar_select %p377, %s376, 31
          %s379 = smul.addr %s378, 8
          %s380 = scalar_lea.vmem %s1, %s379
          %s381 = smul.u32 16, %s26
        $region56: #{tpu_custom_call.1} parent=47 // pred_fallthru
          _
      $region48: #{tpu_custom_call.1} parent=5 // pred_fallthru
        _
      %p382 = scmp.le.s32.totalorder 1, %s26
      %p383 = scmp.lt.s32.totalorder %s26, 3
      %p384 = pnand %p382, %p383
      %p385 = pneg %p384
      // Predicated region
      $region57: #{tpu_custom_call.1} parent=5 // pred_check
        _
      $region58: #{tpu_custom_call.1} parent=5 // pred_check_branch
        %387 = sbr.rel (%p384) target = $region60
      $region59: #{tpu_custom_call.1} parent=5 // pred_region
        %s388 = ssub.s32 %s26, 1
        // Predicated region
        $region61: #{tpu_custom_call.1} parent=59 // pred_check
          %p389 = pneg %p99
        $region62: #{tpu_custom_call.1} parent=59 // pred_check_branch
          %391 = sbr.rel (%p389) target = $region64
        $region63: #{tpu_custom_call.1} parent=59 // pred_region
          %393 = dma.done [#allocation3], 2048
        $region64: #{tpu_custom_call.1} parent=59 // pred_fallthru
          _
        // Predicated region
        $region65: #{tpu_custom_call.1} parent=59 // pred_check
          %p394 = pneg %p225
        $region66: #{tpu_custom_call.1} parent=59 // pred_check_branch
          %396 = sbr.rel (%p394) target = $region68
        $region67: #{tpu_custom_call.1} parent=59 // pred_region
          %398 = dma.done [#allocation6], 2048
        $region68: #{tpu_custom_call.1} parent=59 // pred_fallthru
          _
        %s399 = smul.u32 16, %s31
        %p400 = scmp.lt.s32.totalorder %s399, 31
        %s401 = scalar_select %p400, %s399, 31
        %s402 = smul.addr %s401, 2
        %s403 = smul.addr %s402, 4
        %s404 = scalar_lea.vmem %s0, %s403
        %p405 = pneg %p52
        %p406 = pneg %p49
        %s407 = smul.u32 16, %s31
        %p408 = scmp.lt.s32.totalorder %s407, 31
        %s409 = scalar_select %p408, %s407, 31
        %s410 = smul.addr %s409, 8
        %s411 = scalar_lea.vmem %s1, %s410
        %p412 = pneg %p78
        %p413 = pneg %p75
        %p414 = pneg %p99
        %p415 = pneg %p96
        %p416 = pneg %p120
        %p417 = pneg %p117
        %p418 = pneg %p141
        %p419 = pneg %p138
        %p420 = pneg %p162
        %p421 = pneg %p159
        %p422 = pneg %p183
        %p423 = pneg %p180
        %p424 = pneg %p204
        %p425 = pneg %p201
        %p426 = pneg %p225
        %p427 = pneg %p222
        %p428 = pneg %p246
        %p429 = pneg %p243
        %p430 = pneg %p272
        %p431 = pneg %p269
        %s432 = sand.u32 %s259, 1
        %s433 = scalar_lea.sflag [#allocation4], %s432
        %s434 = sand.u32 %s259, 1
        %s435 = smul.addr %s434, 128
        %s436 = scalar_lea.vmem [#allocation7], %s435
        %p437 = pneg %p298
        %p438 = pneg %p295
        %s439 = sand.u32 %s285, 1
        %s440 = scalar_lea.sflag [#allocation9], %s439
        %s441 = sand.u32 %s285, 1
        %s442 = smul.addr %s441, 256
        %s443 = scalar_lea.vmem [#allocation8], %s442
        %s444 = smul.u32 16, %s31
        %p445 = scmp.lt.s32.totalorder %s444, 31
        %s446 = scalar_select %p445, %s444, 31
        %s447 = smul.addr %s446, 2
        %s448 = smul.addr %s447, 4
        %s449 = scalar_lea.vmem %s0, %s448
        %s450 = smul.u32 16, %s31
        %s451 = smul.u32 16, %s31
        %p452 = scmp.lt.s32.totalorder %s451, 31
        %s453 = scalar_select %p452, %s451, 31
        %s454 = smul.addr %s453, 8
        %s455 = scalar_lea.vmem %s1, %s454
        %s456 = smul.u32 16, %s31
        %s457 = smul.u32 16, %s31
        %s458 = smul.u32 16, %s31
        %v459 = vld [vmem:[%s449] sm:$0xff]
        %v460 = vld [vmem:[%s449 + $0x8] sm:$0xff]
        %v461 = vld [vmem:[%s449 + $0x10] sm:$0xff]
        %v462 = vld [vmem:[%s449 + $0x18] sm:$0xff]
        %v463 = vld [vmem:[%s449 + $0x20] sm:$0xff]
        %v464 = vld [vmem:[%s449 + $0x28] sm:$0xff]
        %v465 = vld [vmem:[%s449 + $0x30] sm:$0xff]
        %v466 = vld [vmem:[%s449 + $0x38] sm:$0xff]
        %v467 = vld [vmem:[%s449 + $0x40] sm:$0xff]
        %v468 = vld [vmem:[%s449 + $0x48] sm:$0xff]
        %v469 = vld [vmem:[%s449 + $0x50] sm:$0xff]
        %v470 = vld [vmem:[%s449 + $0x58] sm:$0xff]
        %v471 = vld [vmem:[%s449 + $0x60] sm:$0xff]
        %v472 = vld [vmem:[%s449 + $0x68] sm:$0xff]
        %v473 = vld [vmem:[%s449 + $0x70] sm:$0xff]
        %v474 = vld [vmem:[%s449 + $0x78] sm:$0xff]
        %v475 = vld [vmem:[#allocation2] sm:$0xf]
        %v476 = vld [vmem:[#allocation2 + $0x4] sm:$0xf]
        %v477 = vld [vmem:[#allocation2 + $0x8] sm:$0xf]
        %v478 = vld [vmem:[#allocation2 + $0xc] sm:$0xf]
        %v479 = vld [vmem:[#allocation2 + $0x10] sm:$0xf]
        %v480 = vld [vmem:[#allocation2 + $0x14] sm:$0xf]
        %v481 = vld [vmem:[#allocation2 + $0x18] sm:$0xf]
        %v482 = vld [vmem:[#allocation2 + $0x1c] sm:$0xf]
        %v483 = vld [vmem:[#allocation2 + $0x20] sm:$0xf]
        %v484 = vld [vmem:[#allocation2 + $0x24] sm:$0xf]
        %v485 = vld [vmem:[#allocation2 + $0x28] sm:$0xf]
        %v486 = vld [vmem:[#allocation2 + $0x2c] sm:$0xf]
        %v487 = vld [vmem:[#allocation2 + $0x30] sm:$0xf]
        %v488 = vld [vmem:[#allocation2 + $0x34] sm:$0xf]
        %v489 = vld [vmem:[#allocation2 + $0x38] sm:$0xf]
        %v490 = vld [vmem:[#allocation2 + $0x3c] sm:$0xf]
        %v491 = vld [vmem:[#allocation2 + $0x40] sm:$0xf]
        %v492 = vld [vmem:[#allocation2 + $0x44] sm:$0xf]
        %v493 = vld [vmem:[#allocation2 + $0x48] sm:$0xf]
        %v494 = vld [vmem:[#allocation2 + $0x4c] sm:$0xf]
        %v495 = vld [vmem:[#allocation2 + $0x50] sm:$0xf]
        %v496 = vld [vmem:[#allocation2 + $0x54] sm:$0xf]
        %v497 = vld [vmem:[#allocation2 + $0x58] sm:$0xf]
        %v498 = vld [vmem:[#allocation2 + $0x5c] sm:$0xf]
        %v499 = vld [vmem:[#allocation2 + $0x60] sm:$0xf]
        %v500 = vld [vmem:[#allocation2 + $0x64] sm:$0xf]
        %v501 = vld [vmem:[#allocation2 + $0x68] sm:$0xf]
        %v502 = vld [vmem:[#allocation2 + $0x6c] sm:$0xf]
        %v503 = vld [vmem:[#allocation2 + $0x70] sm:$0xf]
        %v504 = vld [vmem:[#allocation2 + $0x74] sm:$0xf]
        %v505 = vld [vmem:[#allocation2 + $0x78] sm:$0xf]
        %v506 = vld [vmem:[#allocation2 + $0x7c] sm:$0xf]
        %v507 = vld [vmem:[%s3] sm:$0x1]
        %v509 = vperm.slane %v507, 0
        %v527 = vunpack.c.l.b16 %v459
        %v528 = vunpack.c.h.b16 %v459
        %v529 = vunpack.c.l.b16 %v460
        %v530 = vunpack.c.h.b16 %v460
        %v531 = vunpack.c.l.b16 %v461
        %v532 = vunpack.c.h.b16 %v461
        %v533 = vunpack.c.l.b16 %v462
        %v534 = vunpack.c.h.b16 %v462
        %v535 = vunpack.c.l.b16 %v463
        %v536 = vunpack.c.h.b16 %v463
        %v537 = vunpack.c.l.b16 %v464
        %v538 = vunpack.c.h.b16 %v464
        %v539 = vunpack.c.l.b16 %v465
        %v540 = vunpack.c.h.b16 %v465
        %v541 = vunpack.c.l.b16 %v466
        %v542 = vunpack.c.h.b16 %v466
        %v543 = vunpack.c.l.b16 %v467
        %v544 = vunpack.c.h.b16 %v467
        %v545 = vunpack.c.l.b16 %v468
        %v546 = vunpack.c.h.b16 %v468
        %v547 = vunpack.c.l.b16 %v469
        %v548 = vunpack.c.h.b16 %v469
        %v549 = vunpack.c.l.b16 %v470
        %v550 = vunpack.c.h.b16 %v470
        %v551 = vunpack.c.l.b16 %v471
        %v552 = vunpack.c.h.b16 %v471
        %v553 = vunpack.c.l.b16 %v472
        %v554 = vunpack.c.h.b16 %v472
        %v555 = vunpack.c.l.b16 %v473
        %v556 = vunpack.c.h.b16 %v473
        %v557 = vunpack.c.l.b16 %v474
        %v558 = vunpack.c.h.b16 %v474
        %v559 = vpack.c.b16 %v529, %v527
        %v560 = vpack.c.b16 %v530, %v528
        %v561 = vpack.c.b16 %v533, %v531
        %v562 = vpack.c.b16 %v534, %v532
        %v563 = vpack.c.b16 %v537, %v535
        %v564 = vpack.c.b16 %v538, %v536
        %v565 = vpack.c.b16 %v541, %v539
        %v566 = vpack.c.b16 %v542, %v540
        %v567 = vpack.c.b16 %v545, %v543
        %v568 = vpack.c.b16 %v546, %v544
        %v569 = vpack.c.b16 %v549, %v547
        %v570 = vpack.c.b16 %v550, %v548
        %v571 = vpack.c.b16 %v553, %v551
        %v572 = vpack.c.b16 %v554, %v552
        %v573 = vpack.c.b16 %v557, %v555
        %v574 = vpack.c.b16 %v558, %v556
        %v623 = vunpack.c.l.b16 %v475
        %v624 = vunpack.c.l.b16 %v476
        %v625 = vunpack.c.l.b16 %v477
        %v626 = vunpack.c.l.b16 %v478
        %v627 = vunpack.c.l.b16 %v479
        %v628 = vunpack.c.l.b16 %v480
        %v629 = vunpack.c.l.b16 %v481
        %v630 = vunpack.c.l.b16 %v482
        %v631 = vunpack.c.l.b16 %v483
        %v632 = vunpack.c.l.b16 %v484
        %v633 = vunpack.c.l.b16 %v485
        %v634 = vunpack.c.l.b16 %v486
        %v635 = vunpack.c.l.b16 %v487
        %v636 = vunpack.c.l.b16 %v488
        %v637 = vunpack.c.l.b16 %v489
        %v638 = vunpack.c.l.b16 %v490
        %v639 = vunpack.c.l.b16 %v491
        %v640 = vunpack.c.l.b16 %v492
        %v641 = vunpack.c.l.b16 %v493
        %v642 = vunpack.c.l.b16 %v494
        %v643 = vunpack.c.l.b16 %v495
        %v644 = vunpack.c.l.b16 %v496
        %v645 = vunpack.c.l.b16 %v497
        %v646 = vunpack.c.l.b16 %v498
        %v647 = vunpack.c.l.b16 %v499
        %v648 = vunpack.c.l.b16 %v500
        %v649 = vunpack.c.l.b16 %v501
        %v650 = vunpack.c.l.b16 %v502
        %v651 = vunpack.c.l.b16 %v503
        %v652 = vunpack.c.l.b16 %v504
        %v653 = vunpack.c.l.b16 %v505
        %v654 = vunpack.c.l.b16 %v506
        %v655 = vpack.c.b16 %v624, %v623
        %v656 = vpack.c.b16 %v626, %v625
        %v657 = vpack.c.b16 %v628, %v627
        %v658 = vpack.c.b16 %v630, %v629
        %v659 = vpack.c.b16 %v632, %v631
        %v660 = vpack.c.b16 %v634, %v633
        %v661 = vpack.c.b16 %v636, %v635
        %v662 = vpack.c.b16 %v638, %v637
        %v663 = vpack.c.b16 %v640, %v639
        %v664 = vpack.c.b16 %v642, %v641
        %v665 = vpack.c.b16 %v644, %v643
        %v666 = vpack.c.b16 %v646, %v645
        %v667 = vpack.c.b16 %v648, %v647
        %v668 = vpack.c.b16 %v650, %v649
        %v669 = vpack.c.b16 %v652, %v651
        %v670 = vpack.c.b16 %v654, %v653
        %687 = vmatpush.bf16.msra.mxu0 %v662
        %688 = vmatpush.bf16.msra.mxu0 %v661
        %689 = vmatpush.bf16.msra.mxu0 %v660
        %690 = vmatpush.bf16.msra.mxu0 %v659
        %691 = vmatpush.bf16.msra.mxu0 %v658
        %692 = vmatpush.bf16.msra.mxu0 %v657
        %693 = vmatpush.bf16.msra.mxu0 %v656
        %694 = vmatpush.bf16.msra.mxu0 %v655
        %695 = vmatmul.bf16.gmra.mxu0 %v559
        %v696 = vpop.f32.mrf.mxu0
        %v697 = vadd.f32 %v509, %v696
        %v698 = vpop.f32.mrf.mxu0
        %v699 = vadd.f32 %v509, %v698
        %700 = vmatmul.bf16.gmra.mxu0 %v561
        %v701 = vpop.f32.mrf.mxu0
        %v702 = vadd.f32 %v509, %v701
        %v703 = vpop.f32.mrf.mxu0
        %v704 = vadd.f32 %v509, %v703
        %705 = vmatmul.bf16.gmra.mxu0 %v563
        %v706 = vpop.f32.mrf.mxu0
        %v707 = vadd.f32 %v509, %v706
        %v708 = vpop.f32.mrf.mxu0
        %v709 = vadd.f32 %v509, %v708
        %710 = vmatmul.bf16.gmra.mxu0 %v565
        %v711 = vpop.f32.mrf.mxu0
        %v712 = vadd.f32 %v509, %v711
        %v713 = vpop.f32.mrf.mxu0
        %v714 = vadd.f32 %v509, %v713
        %715 = vmatmul.bf16.gmra.mxu0 %v567
        %v716 = vpop.f32.mrf.mxu0
        %v717 = vadd.f32 %v509, %v716
        %v718 = vpop.f32.mrf.mxu0
        %v719 = vadd.f32 %v509, %v718
        %720 = vmatmul.bf16.gmra.mxu0 %v569
        %v721 = vpop.f32.mrf.mxu0
        %v722 = vadd.f32 %v509, %v721
        %v723 = vpop.f32.mrf.mxu0
        %v724 = vadd.f32 %v509, %v723
        %725 = vmatmul.bf16.gmra.mxu0 %v571
        %v726 = vpop.f32.mrf.mxu0
        %v727 = vadd.f32 %v509, %v726
        %v728 = vpop.f32.mrf.mxu0
        %v729 = vadd.f32 %v509, %v728
        %730 = vmatmul.bf16.gmra.mxu0 %v573
        %v731 = vpop.f32.mrf.mxu0
        %v732 = vadd.f32 %v509, %v731
        %v733 = vpop.f32.mrf.mxu0
        %v734 = vadd.f32 %v509, %v733
        %735 = vdwg.mxu0
        %736 = vmatpush.bf16.msra.mxu0 %v670
        %737 = vmatpush.bf16.msra.mxu0 %v669
        %738 = vmatpush.bf16.msra.mxu0 %v668
        %739 = vmatpush.bf16.msra.mxu0 %v667
        %740 = vmatpush.bf16.msra.mxu0 %v666
        %741 = vmatpush.bf16.msra.mxu0 %v665
        %742 = vmatpush.bf16.msra.mxu0 %v664
        %743 = vmatpush.bf16.msra.mxu0 %v663
        %744 = vmatmul.bf16.gmra.mxu0 %v560
        %v745 = vpop.f32.mrf.mxu0
        %v746 = vadd.f32 %v697, %v745
        %v747 = vpop.f32.mrf.mxu0
        %v748 = vadd.f32 %v699, %v747
        %749 = vmatmul.bf16.gmra.mxu0 %v562
        %v750 = vpop.f32.mrf.mxu0
        %v751 = vadd.f32 %v702, %v750
        %v752 = vpop.f32.mrf.mxu0
        %v753 = vadd.f32 %v704, %v752
        %754 = vmatmul.bf16.gmra.mxu0 %v564
        %v755 = vpop.f32.mrf.mxu0
        %v756 = vadd.f32 %v707, %v755
        %v757 = vpop.f32.mrf.mxu0
        %v758 = vadd.f32 %v709, %v757
        %759 = vmatmul.bf16.gmra.mxu0 %v566
        %v760 = vpop.f32.mrf.mxu0
        %v761 = vadd.f32 %v712, %v760
        %v762 = vpop.f32.mrf.mxu0
        %v763 = vadd.f32 %v714, %v762
        %764 = vmatmul.bf16.gmra.mxu0 %v568
        %v765 = vpop.f32.mrf.mxu0
        %v766 = vadd.f32 %v717, %v765
        %v767 = vpop.f32.mrf.mxu0
        %v768 = vadd.f32 %v719, %v767
        %769 = vmatmul.bf16.gmra.mxu0 %v570
        %v770 = vpop.f32.mrf.mxu0
        %v771 = vadd.f32 %v722, %v770
        %v772 = vpop.f32.mrf.mxu0
        %v773 = vadd.f32 %v724, %v772
        %774 = vmatmul.bf16.gmra.mxu0 %v572
        %v775 = vpop.f32.mrf.mxu0
        %v776 = vadd.f32 %v727, %v775
        %v777 = vpop.f32.mrf.mxu0
        %v778 = vadd.f32 %v729, %v777
        %779 = vmatmul.bf16.gmra.mxu0 %v574
        %v780 = vpop.f32.mrf.mxu0
        %v781 = vadd.f32 %v732, %v780
        %v782 = vpop.f32.mrf.mxu0
        %v783 = vadd.f32 %v734, %v782
        %784 = vdwg.mxu0
        %v785 = vtanh.pop %v746
        %v786 = vtanh.pop %v748
        %v787 = vtanh.pop %v751
        %v788 = vtanh.pop %v753
        %v789 = vtanh.pop %v756
        %v790 = vtanh.pop %v758
        %v791 = vtanh.pop %v761
        %v792 = vtanh.pop %v763
        %v793 = vtanh.pop %v766
        %v794 = vtanh.pop %v768
        %v795 = vtanh.pop %v771
        %v796 = vtanh.pop %v773
        %v797 = vtanh.pop %v776
        %v798 = vtanh.pop %v778
        %v799 = vtanh.pop %v781
        %v800 = vtanh.pop %v783
        %v801 = vpack.c.bf16 %v786, %v785
        %v802 = vpack.c.bf16 %v788, %v787
        %v803 = vpack.c.bf16 %v790, %v789
        %v804 = vpack.c.bf16 %v792, %v791
        %v805 = vpack.c.bf16 %v794, %v793
        %v806 = vpack.c.bf16 %v796, %v795
        %v807 = vpack.c.bf16 %v798, %v797
        %v808 = vpack.c.bf16 %v800, %v799
        %v809 = vld [vmem:[%s4] sm:$0xf]
        %v810 = vld [vmem:[%s4 + $0x4] sm:$0xf]
        %v811 = vld [vmem:[%s4 + $0x8] sm:$0xf]
        %v812 = vld [vmem:[%s4 + $0xc] sm:$0xf]
        %v813 = vld [vmem:[%s4 + $0x10] sm:$0xf]
        %v814 = vld [vmem:[%s4 + $0x14] sm:$0xf]
        %v815 = vld [vmem:[%s4 + $0x18] sm:$0xf]
        %v816 = vld [vmem:[%s4 + $0x1c] sm:$0xf]
        %v817 = vld [vmem:[%s4 + $0x20] sm:$0xf]
        %v818 = vld [vmem:[%s4 + $0x24] sm:$0xf]
        %v819 = vld [vmem:[%s4 + $0x28] sm:$0xf]
        %v820 = vld [vmem:[%s4 + $0x2c] sm:$0xf]
        %v821 = vld [vmem:[%s4 + $0x30] sm:$0xf]
        %v822 = vld [vmem:[%s4 + $0x34] sm:$0xf]
        %v823 = vld [vmem:[%s4 + $0x38] sm:$0xf]
        %v824 = vld [vmem:[%s4 + $0x3c] sm:$0xf]
        %v825 = vld [vmem:[%s5] sm:$0x1]
        %v827 = vperm.slane %v825, 0
        %v845 = vunpack.c.l.b16 %v809
        %v846 = vunpack.c.l.b16 %v810
        %v847 = vunpack.c.l.b16 %v811
        %v848 = vunpack.c.l.b16 %v812
        %v849 = vunpack.c.l.b16 %v813
        %v850 = vunpack.c.l.b16 %v814
        %v851 = vunpack.c.l.b16 %v815
        %v852 = vunpack.c.l.b16 %v816
        %v853 = vunpack.c.l.b16 %v817
        %v854 = vunpack.c.l.b16 %v818
        %v855 = vunpack.c.l.b16 %v819
        %v856 = vunpack.c.l.b16 %v820
        %v857 = vunpack.c.l.b16 %v821
        %v858 = vunpack.c.l.b16 %v822
        %v859 = vunpack.c.l.b16 %v823
        %v860 = vunpack.c.l.b16 %v824
        %v861 = vpack.c.b16 %v846, %v845
        %v862 = vpack.c.b16 %v848, %v847
        %v863 = vpack.c.b16 %v850, %v849
        %v864 = vpack.c.b16 %v852, %v851
        %v865 = vpack.c.b16 %v854, %v853
        %v866 = vpack.c.b16 %v856, %v855
        %v867 = vpack.c.b16 %v858, %v857
        %v868 = vpack.c.b16 %v860, %v859
        %877 = vmatpush.bf16.msra.mxu0 %v868
        %878 = vmatpush.bf16.msra.mxu0 %v867
        %879 = vmatpush.bf16.msra.mxu0 %v866
        %880 = vmatpush.bf16.msra.mxu0 %v865
        %881 = vmatpush.bf16.msra.mxu0 %v864
        %882 = vmatpush.bf16.msra.mxu0 %v863
        %883 = vmatpush.bf16.msra.mxu0 %v862
        %884 = vmatpush.bf16.msra.mxu0 %v861
        %885 = vmatmul.bf16.gmra.mxu0 %v801
        %v886 = vpop.f32.mrf.mxu0
        %v887 = vadd.f32 %v827, %v886
        %v888 = vpop.f32.mrf.mxu0
        %v889 = vadd.f32 %v827, %v888
        %890 = vmatmul.bf16.gmra.mxu0 %v802
        %v891 = vpop.f32.mrf.mxu0
        %v892 = vadd.f32 %v827, %v891
        %v893 = vpop.f32.mrf.mxu0
        %v894 = vadd.f32 %v827, %v893
        %895 = vmatmul.bf16.gmra.mxu0 %v803
        %v896 = vpop.f32.mrf.mxu0
        %v897 = vadd.f32 %v827, %v896
        %v898 = vpop.f32.mrf.mxu0
        %v899 = vadd.f32 %v827, %v898
        %900 = vmatmul.bf16.gmra.mxu0 %v804
        %v901 = vpop.f32.mrf.mxu0
        %v902 = vadd.f32 %v827, %v901
        %v903 = vpop.f32.mrf.mxu0
        %v904 = vadd.f32 %v827, %v903
        %905 = vmatmul.bf16.gmra.mxu0 %v805
        %v906 = vpop.f32.mrf.mxu0
        %v907 = vadd.f32 %v827, %v906
        %v908 = vpop.f32.mrf.mxu0
        %v909 = vadd.f32 %v827, %v908
        %910 = vmatmul.bf16.gmra.mxu0 %v806
        %v911 = vpop.f32.mrf.mxu0
        %v912 = vadd.f32 %v827, %v911
        %v913 = vpop.f32.mrf.mxu0
        %v914 = vadd.f32 %v827, %v913
        %915 = vmatmul.bf16.gmra.mxu0 %v807
        %v916 = vpop.f32.mrf.mxu0
        %v917 = vadd.f32 %v827, %v916
        %v918 = vpop.f32.mrf.mxu0
        %v919 = vadd.f32 %v827, %v918
        %920 = vmatmul.bf16.gmra.mxu0 %v808
        %v921 = vpop.f32.mrf.mxu0
        %v922 = vadd.f32 %v827, %v921
        %v923 = vpop.f32.mrf.mxu0
        %v924 = vadd.f32 %v827, %v923
        %925 = vdwg.mxu0
        %v926 = vmax.f32 %v887, 0.0
        %v927 = vmax.f32 %v889, 0.0
        %v928 = vmax.f32 %v892, 0.0
        %v929 = vmax.f32 %v894, 0.0
        %v930 = vmax.f32 %v897, 0.0
        %v931 = vmax.f32 %v899, 0.0
        %v932 = vmax.f32 %v902, 0.0
        %v933 = vmax.f32 %v904, 0.0
        %v934 = vmax.f32 %v907, 0.0
        %v935 = vmax.f32 %v909, 0.0
        %v936 = vmax.f32 %v912, 0.0
        %v937 = vmax.f32 %v914, 0.0
        %v938 = vmax.f32 %v917, 0.0
        %v939 = vmax.f32 %v919, 0.0
        %v940 = vmax.f32 %v922, 0.0
        %v941 = vmax.f32 %v924, 0.0
        %vm942 = vcmp.ne.f32.partialorder %v887, %v887
        %vm943 = vcmp.ne.f32.partialorder %v889, %v889
        %vm944 = vcmp.ne.f32.partialorder %v892, %v892
        %vm945 = vcmp.ne.f32.partialorder %v894, %v894
        %vm946 = vcmp.ne.f32.partialorder %v897, %v897
        %vm947 = vcmp.ne.f32.partialorder %v899, %v899
        %vm948 = vcmp.ne.f32.partialorder %v902, %v902
        %vm949 = vcmp.ne.f32.partialorder %v904, %v904
        %vm950 = vcmp.ne.f32.partialorder %v907, %v907
        %vm951 = vcmp.ne.f32.partialorder %v909, %v909
        %vm952 = vcmp.ne.f32.partialorder %v912, %v912
        %vm953 = vcmp.ne.f32.partialorder %v914, %v914
        %vm954 = vcmp.ne.f32.partialorder %v917, %v917
        %vm955 = vcmp.ne.f32.partialorder %v919, %v919
        %vm956 = vcmp.ne.f32.partialorder %v922, %v922
        %vm957 = vcmp.ne.f32.partialorder %v924, %v924
        %v958 = vadd.f32 %v887, 0.0
        %v959 = vadd.f32 %v889, 0.0
        %v960 = vadd.f32 %v892, 0.0
        %v961 = vadd.f32 %v894, 0.0
        %v962 = vadd.f32 %v897, 0.0
        %v963 = vadd.f32 %v899, 0.0
        %v964 = vadd.f32 %v902, 0.0
        %v965 = vadd.f32 %v904, 0.0
        %v966 = vadd.f32 %v907, 0.0
        %v967 = vadd.f32 %v909, 0.0
        %v968 = vadd.f32 %v912, 0.0
        %v969 = vadd.f32 %v914, 0.0
        %v970 = vadd.f32 %v917, 0.0
        %v971 = vadd.f32 %v919, 0.0
        %v972 = vadd.f32 %v922, 0.0
        %v973 = vadd.f32 %v924, 0.0
        %v974 = vand.u32 2147483647, %v887
        %v975 = vand.u32 2147483647, %v889
        %v976 = vand.u32 2147483647, %v892
        %v977 = vand.u32 2147483647, %v894
        %v978 = vand.u32 2147483647, %v897
        %v979 = vand.u32 2147483647, %v899
        %v980 = vand.u32 2147483647, %v902
        %v981 = vand.u32 2147483647, %v904
        %v982 = vand.u32 2147483647, %v907
        %v983 = vand.u32 2147483647, %v909
        %v984 = vand.u32 2147483647, %v912
        %v985 = vand.u32 2147483647, %v914
        %v986 = vand.u32 2147483647, %v917
        %v987 = vand.u32 2147483647, %v919
        %v988 = vand.u32 2147483647, %v922
        %v989 = vand.u32 2147483647, %v924
        %v990 = vsub.f32 0.0, %v974
        %v991 = vsub.f32 0.0, %v975
        %v992 = vsub.f32 0.0, %v976
        %v993 = vsub.f32 0.0, %v977
        %v994 = vsub.f32 0.0, %v978
        %v995 = vsub.f32 0.0, %v979
        %v996 = vsub.f32 0.0, %v980
        %v997 = vsub.f32 0.0, %v981
        %v998 = vsub.f32 0.0, %v982
        %v999 = vsub.f32 0.0, %v983
        %v1000 = vsub.f32 0.0, %v984
        %v1001 = vsub.f32 0.0, %v985
        %v1002 = vsub.f32 0.0, %v986
        %v1003 = vsub.f32 0.0, %v987
        %v1004 = vsub.f32 0.0, %v988
        %v1005 = vsub.f32 0.0, %v989
        %v1006 = vmul.f32 %v990, 1.442695
        %v1007 = vpow.pop %v1006
        %v1008 = vmul.f32 %v991, 1.442695
        %v1009 = vpow.pop %v1008
        %v1010 = vmul.f32 %v992, 1.442695
        %v1011 = vpow.pop %v1010
        %v1012 = vmul.f32 %v993, 1.442695
        %v1013 = vpow.pop %v1012
        %v1014 = vmul.f32 %v994, 1.442695
        %v1015 = vpow.pop %v1014
        %v1016 = vmul.f32 %v995, 1.442695
        %v1017 = vpow.pop %v1016
        %v1018 = vmul.f32 %v996, 1.442695
        %v1019 = vpow.pop %v1018
        %v1020 = vmul.f32 %v997, 1.442695
        %v1021 = vpow.pop %v1020
        %v1022 = vmul.f32 %v998, 1.442695
        %v1023 = vpow.pop %v1022
        %v1024 = vmul.f32 %v999, 1.442695
        %v1025 = vpow.pop %v1024
        %v1026 = vmul.f32 %v1000, 1.442695
        %v1027 = vpow.pop %v1026
        %v1028 = vmul.f32 %v1001, 1.442695
        %v1029 = vpow.pop %v1028
        %v1030 = vmul.f32 %v1002, 1.442695
        %v1031 = vpow.pop %v1030
        %v1032 = vmul.f32 %v1003, 1.442695
        %v1033 = vpow.pop %v1032
        %v1034 = vmul.f32 %v1004, 1.442695
        %v1035 = vpow.pop %v1034
        %v1036 = vmul.f32 %v1005, 1.442695
        %v1037 = vpow.pop %v1036
        %v1038 = vadd.f32 %v1007, 1.0
        %v1039 = vlog2.pop %v1038
        %v1040 = vmul.f32 %v1039, 0.6931472
        %v1041 = vmul.f32 -0.5, %v1007
        %v1042 = vadd.f32 %v1041, 1.0
        %v1043 = vmul.f32 %v1042, %v1007
        %v1044 = vand.u32 2147483647, %v1007
        %vm1045 = vcmp.lt.f32.partialorder %v1044, 0.0004427343
        %v1046 = vsel %vm1045, %v1043, %v1040
        %v1047 = vadd.f32 %v1009, 1.0
        %v1048 = vlog2.pop %v1047
        %v1049 = vmul.f32 %v1048, 0.6931472
        %v1050 = vmul.f32 -0.5, %v1009
        %v1051 = vadd.f32 %v1050, 1.0
        %v1052 = vmul.f32 %v1051, %v1009
        %v1053 = vand.u32 2147483647, %v1009
        %vm1054 = vcmp.lt.f32.partialorder %v1053, 0.0004427343
        %v1055 = vsel %vm1054, %v1052, %v1049
        %v1056 = vadd.f32 %v1011, 1.0
        %v1057 = vlog2.pop %v1056
        %v1058 = vmul.f32 %v1057, 0.6931472
        %v1059 = vmul.f32 -0.5, %v1011
        %v1060 = vadd.f32 %v1059, 1.0
        %v1061 = vmul.f32 %v1060, %v1011
        %v1062 = vand.u32 2147483647, %v1011
        %vm1063 = vcmp.lt.f32.partialorder %v1062, 0.0004427343
        %v1064 = vsel %vm1063, %v1061, %v1058
        %v1065 = vadd.f32 %v1013, 1.0
        %v1066 = vlog2.pop %v1065
        %v1067 = vmul.f32 %v1066, 0.6931472
        %v1068 = vmul.f32 -0.5, %v1013
        %v1069 = vadd.f32 %v1068, 1.0
        %v1070 = vmul.f32 %v1069, %v1013
        %v1071 = vand.u32 2147483647, %v1013
        %vm1072 = vcmp.lt.f32.partialorder %v1071, 0.0004427343
        %v1073 = vsel %vm1072, %v1070, %v1067
        %v1074 = vadd.f32 %v1015, 1.0
        %v1075 = vlog2.pop %v1074
        %v1076 = vmul.f32 %v1075, 0.6931472
        %v1077 = vmul.f32 -0.5, %v1015
        %v1078 = vadd.f32 %v1077, 1.0
        %v1079 = vmul.f32 %v1078, %v1015
        %v1080 = vand.u32 2147483647, %v1015
        %vm1081 = vcmp.lt.f32.partialorder %v1080, 0.0004427343
        %v1082 = vsel %vm1081, %v1079, %v1076
        %v1083 = vadd.f32 %v1017, 1.0
        %v1084 = vlog2.pop %v1083
        %v1085 = vmul.f32 %v1084, 0.6931472
        %v1086 = vmul.f32 -0.5, %v1017
        %v1087 = vadd.f32 %v1086, 1.0
        %v1088 = vmul.f32 %v1087, %v1017
        %v1089 = vand.u32 2147483647, %v1017
        %vm1090 = vcmp.lt.f32.partialorder %v1089, 0.0004427343
        %v1091 = vsel %vm1090, %v1088, %v1085
        %v1092 = vadd.f32 %v1019, 1.0
        %v1093 = vlog2.pop %v1092
        %v1094 = vmul.f32 %v1093, 0.6931472
        %v1095 = vmul.f32 -0.5, %v1019
        %v1096 = vadd.f32 %v1095, 1.0
        %v1097 = vmul.f32 %v1096, %v1019
        %v1098 = vand.u32 2147483647, %v1019
        %vm1099 = vcmp.lt.f32.partialorder %v1098, 0.0004427343
        %v1100 = vsel %vm1099, %v1097, %v1094
        %v1101 = vadd.f32 %v1021, 1.0
        %v1102 = vlog2.pop %v1101
        %v1103 = vmul.f32 %v1102, 0.6931472
        %v1104 = vmul.f32 -0.5, %v1021
        %v1105 = vadd.f32 %v1104, 1.0
        %v1106 = vmul.f32 %v1105, %v1021
        %v1107 = vand.u32 2147483647, %v1021
        %vm1108 = vcmp.lt.f32.partialorder %v1107, 0.0004427343
        %v1109 = vsel %vm1108, %v1106, %v1103
        %v1110 = vadd.f32 %v1023, 1.0
        %v1111 = vlog2.pop %v1110
        %v1112 = vmul.f32 %v1111, 0.6931472
        %v1113 = vmul.f32 -0.5, %v1023
        %v1114 = vadd.f32 %v1113, 1.0
        %v1115 = vmul.f32 %v1114, %v1023
        %v1116 = vand.u32 2147483647, %v1023
        %vm1117 = vcmp.lt.f32.partialorder %v1116, 0.0004427343
        %v1118 = vsel %vm1117, %v1115, %v1112
        %v1119 = vadd.f32 %v1025, 1.0
        %v1120 = vlog2.pop %v1119
        %v1121 = vmul.f32 %v1120, 0.6931472
        %v1122 = vmul.f32 -0.5, %v1025
        %v1123 = vadd.f32 %v1122, 1.0
        %v1124 = vmul.f32 %v1123, %v1025
        %v1125 = vand.u32 2147483647, %v1025
        %vm1126 = vcmp.lt.f32.partialorder %v1125, 0.0004427343
        %v1127 = vsel %vm1126, %v1124, %v1121
        %v1128 = vadd.f32 %v1027, 1.0
        %v1129 = vlog2.pop %v1128
        %v1130 = vmul.f32 %v1129, 0.6931472
        %v1131 = vmul.f32 -0.5, %v1027
        %v1132 = vadd.f32 %v1131, 1.0
        %v1133 = vmul.f32 %v1132, %v1027
        %v1134 = vand.u32 2147483647, %v1027
        %vm1135 = vcmp.lt.f32.partialorder %v1134, 0.0004427343
        %v1136 = vsel %vm1135, %v1133, %v1130
        %v1137 = vadd.f32 %v1029, 1.0
        %v1138 = vlog2.pop %v1137
        %v1139 = vmul.f32 %v1138, 0.6931472
        %v1140 = vmul.f32 -0.5, %v1029
        %v1141 = vadd.f32 %v1140, 1.0
        %v1142 = vmul.f32 %v1141, %v1029
        %v1143 = vand.u32 2147483647, %v1029
        %vm1144 = vcmp.lt.f32.partialorder %v1143, 0.0004427343
        %v1145 = vsel %vm1144, %v1142, %v1139
        %v1146 = vadd.f32 %v1031, 1.0
        %v1147 = vlog2.pop %v1146
        %v1148 = vmul.f32 %v1147, 0.6931472
        %v1149 = vmul.f32 -0.5, %v1031
        %v1150 = vadd.f32 %v1149, 1.0
        %v1151 = vmul.f32 %v1150, %v1031
        %v1152 = vand.u32 2147483647, %v1031
        %vm1153 = vcmp.lt.f32.partialorder %v1152, 0.0004427343
        %v1154 = vsel %vm1153, %v1151, %v1148
        %v1155 = vadd.f32 %v1033, 1.0
        %v1156 = vlog2.pop %v1155
        %v1157 = vmul.f32 %v1156, 0.6931472
        %v1158 = vmul.f32 -0.5, %v1033
        %v1159 = vadd.f32 %v1158, 1.0
        %v1160 = vmul.f32 %v1159, %v1033
        %v1161 = vand.u32 2147483647, %v1033
        %vm1162 = vcmp.lt.f32.partialorder %v1161, 0.0004427343
        %v1163 = vsel %vm1162, %v1160, %v1157
        %v1164 = vadd.f32 %v1035, 1.0
        %v1165 = vlog2.pop %v1164
        %v1166 = vmul.f32 %v1165, 0.6931472
        %v1167 = vmul.f32 -0.5, %v1035
        %v1168 = vadd.f32 %v1167, 1.0
        %v1169 = vmul.f32 %v1168, %v1035
        %v1170 = vand.u32 2147483647, %v1035
        %vm1171 = vcmp.lt.f32.partialorder %v1170, 0.0004427343
        %v1172 = vsel %vm1171, %v1169, %v1166
        %v1173 = vadd.f32 %v1037, 1.0
        %v1174 = vlog2.pop %v1173
        %v1175 = vmul.f32 %v1174, 0.6931472
        %v1176 = vmul.f32 -0.5, %v1037
        %v1177 = vadd.f32 %v1176, 1.0
        %v1178 = vmul.f32 %v1177, %v1037
        %v1179 = vand.u32 2147483647, %v1037
        %vm1180 = vcmp.lt.f32.partialorder %v1179, 0.0004427343
        %v1181 = vsel %vm1180, %v1178, %v1175
        %v1182 = vadd.f32 %v926, %v1046
        %v1183 = vadd.f32 %v927, %v1055
        %v1184 = vadd.f32 %v928, %v1064
        %v1185 = vadd.f32 %v929, %v1073
        %v1186 = vadd.f32 %v930, %v1082
        %v1187 = vadd.f32 %v931, %v1091
        %v1188 = vadd.f32 %v932, %v1100
        %v1189 = vadd.f32 %v933, %v1109
        %v1190 = vadd.f32 %v934, %v1118
        %v1191 = vadd.f32 %v935, %v1127
        %v1192 = vadd.f32 %v936, %v1136
        %v1193 = vadd.f32 %v937, %v1145
        %v1194 = vadd.f32 %v938, %v1154
        %v1195 = vadd.f32 %v939, %v1163
        %v1196 = vadd.f32 %v940, %v1172
        %v1197 = vadd.f32 %v941, %v1181
        %v1198 = vsel %vm942, %v958, %v1182
        %v1199 = vsel %vm943, %v959, %v1183
        %v1200 = vsel %vm944, %v960, %v1184
        %v1201 = vsel %vm945, %v961, %v1185
        %v1202 = vsel %vm946, %v962, %v1186
        %v1203 = vsel %vm947, %v963, %v1187
        %v1204 = vsel %vm948, %v964, %v1188
        %v1205 = vsel %vm949, %v965, %v1189
        %v1206 = vsel %vm950, %v966, %v1190
        %v1207 = vsel %vm951, %v967, %v1191
        %v1208 = vsel %vm952, %v968, %v1192
        %v1209 = vsel %vm953, %v969, %v1193
        %v1210 = vsel %vm954, %v970, %v1194
        %v1211 = vsel %vm955, %v971, %v1195
        %v1212 = vsel %vm956, %v972, %v1196
        %v1213 = vsel %vm957, %v973, %v1197
        %v1214 = vld [vmem:[%s455] sm:$0xff]
        %v1215 = vld [vmem:[%s455 + $0x8] sm:$0xff]
        %v1216 = vld [vmem:[%s455 + $0x10] sm:$0xff]
        %v1217 = vld [vmem:[%s455 + $0x18] sm:$0xff]
        %v1218 = vld [vmem:[%s455 + $0x20] sm:$0xff]
        %v1219 = vld [vmem:[%s455 + $0x28] sm:$0xff]
        %v1220 = vld [vmem:[%s455 + $0x30] sm:$0xff]
        %v1221 = vld [vmem:[%s455 + $0x38] sm:$0xff]
        %v1222 = vld [vmem:[%s455 + $0x40] sm:$0xff]
        %v1223 = vld [vmem:[%s455 + $0x48] sm:$0xff]
        %v1224 = vld [vmem:[%s455 + $0x50] sm:$0xff]
        %v1225 = vld [vmem:[%s455 + $0x58] sm:$0xff]
        %v1226 = vld [vmem:[%s455 + $0x60] sm:$0xff]
        %v1227 = vld [vmem:[%s455 + $0x68] sm:$0xff]
        %v1228 = vld [vmem:[%s455 + $0x70] sm:$0xff]
        %v1229 = vld [vmem:[%s455 + $0x78] sm:$0xff]
        %1246 = vrot.lane.b32.xlu0 %v1214, 4
        %v1247 = vpop.permute.xlu0 %1246
        %1248 = vrot.lane.b32.xlu0 %v1215, 4
        %v1249 = vpop.permute.xlu0 %1248
        %1250 = vrot.lane.b32.xlu0 %v1216, 4
        %v1251 = vpop.permute.xlu0 %1250
        %1252 = vrot.lane.b32.xlu0 %v1217, 4
        %v1253 = vpop.permute.xlu0 %1252
        %1254 = vrot.lane.b32.xlu0 %v1218, 4
        %v1255 = vpop.permute.xlu0 %1254
        %1256 = vrot.lane.b32.xlu0 %v1219, 4
        %v1257 = vpop.permute.xlu0 %1256
        %1258 = vrot.lane.b32.xlu0 %v1220, 4
        %v1259 = vpop.permute.xlu0 %1258
        %1260 = vrot.lane.b32.xlu0 %v1221, 4
        %v1261 = vpop.permute.xlu0 %1260
        %1262 = vrot.lane.b32.xlu0 %v1222, 4
        %v1263 = vpop.permute.xlu0 %1262
        %1264 = vrot.lane.b32.xlu0 %v1223, 4
        %v1265 = vpop.permute.xlu0 %1264
        %1266 = vrot.lane.b32.xlu0 %v1224, 4
        %v1267 = vpop.permute.xlu0 %1266
        %1268 = vrot.lane.b32.xlu0 %v1225, 4
        %v1269 = vpop.permute.xlu0 %1268
        %1270 = vrot.lane.b32.xlu0 %v1226, 4
        %v1271 = vpop.permute.xlu0 %1270
        %1272 = vrot.lane.b32.xlu0 %v1227, 4
        %v1273 = vpop.permute.xlu0 %1272
        %1274 = vrot.lane.b32.xlu0 %v1228, 4
        %v1275 = vpop.permute.xlu0 %1274
        %1276 = vrot.lane.b32.xlu0 %v1229, 4
        %v1277 = vpop.permute.xlu0 %1276
        %v1294 = vmul.f32 %v1198, %v1247
        %v1295 = vmul.f32 %v1199, %v1249
        %v1296 = vmul.f32 %v1200, %v1251
        %v1297 = vmul.f32 %v1201, %v1253
        %v1298 = vmul.f32 %v1202, %v1255
        %v1299 = vmul.f32 %v1203, %v1257
        %v1300 = vmul.f32 %v1204, %v1259
        %v1301 = vmul.f32 %v1205, %v1261
        %v1302 = vmul.f32 %v1206, %v1263
        %v1303 = vmul.f32 %v1207, %v1265
        %v1304 = vmul.f32 %v1208, %v1267
        %v1305 = vmul.f32 %v1209, %v1269
        %v1306 = vmul.f32 %v1210, %v1271
        %v1307 = vmul.f32 %v1211, %v1273
        %v1308 = vmul.f32 %v1212, %v1275
        %v1309 = vmul.f32 %v1213, %v1277
        %1326 = vrot.lane.b32.xlu0 %v1294, 124
        %v1327 = vpop.permute.xlu0 %1326
        %1328 = vrot.lane.b32.xlu0 %v1295, 124
        %v1329 = vpop.permute.xlu0 %1328
        %1330 = vrot.lane.b32.xlu0 %v1296, 124
        %v1331 = vpop.permute.xlu0 %1330
        %1332 = vrot.lane.b32.xlu0 %v1297, 124
        %v1333 = vpop.permute.xlu0 %1332
        %1334 = vrot.lane.b32.xlu0 %v1298, 124
        %v1335 = vpop.permute.xlu0 %1334
        %1336 = vrot.lane.b32.xlu0 %v1299, 124
        %v1337 = vpop.permute.xlu0 %1336
        %1338 = vrot.lane.b32.xlu0 %v1300, 124
        %v1339 = vpop.permute.xlu0 %1338
        %1340 = vrot.lane.b32.xlu0 %v1301, 124
        %v1341 = vpop.permute.xlu0 %1340
        %1342 = vrot.lane.b32.xlu0 %v1302, 124
        %v1343 = vpop.permute.xlu0 %1342
        %1344 = vrot.lane.b32.xlu0 %v1303, 124
        %v1345 = vpop.permute.xlu0 %1344
        %1346 = vrot.lane.b32.xlu0 %v1304, 124
        %v1347 = vpop.permute.xlu0 %1346
        %1348 = vrot.lane.b32.xlu0 %v1305, 124
        %v1349 = vpop.permute.xlu0 %1348
        %1350 = vrot.lane.b32.xlu0 %v1306, 124
        %v1351 = vpop.permute.xlu0 %1350
        %1352 = vrot.lane.b32.xlu0 %v1307, 124
        %v1353 = vpop.permute.xlu0 %1352
        %1354 = vrot.lane.b32.xlu0 %v1308, 124
        %v1355 = vpop.permute.xlu0 %1354
        %1356 = vrot.lane.b32.xlu0 %v1309, 124
        %v1357 = vpop.permute.xlu0 %1356
        %v1374 = vadd.f32 %v887, %v1327
        %v1375 = vadd.f32 %v889, %v1329
        %v1376 = vadd.f32 %v892, %v1331
        %v1377 = vadd.f32 %v894, %v1333
        %v1378 = vadd.f32 %v897, %v1335
        %v1379 = vadd.f32 %v899, %v1337
        %v1380 = vadd.f32 %v902, %v1339
        %v1381 = vadd.f32 %v904, %v1341
        %v1382 = vadd.f32 %v907, %v1343
        %v1383 = vadd.f32 %v909, %v1345
        %v1384 = vadd.f32 %v912, %v1347
        %v1385 = vadd.f32 %v914, %v1349
        %v1386 = vadd.f32 %v917, %v1351
        %v1387 = vadd.f32 %v919, %v1353
        %v1388 = vadd.f32 %v922, %v1355
        %v1389 = vadd.f32 %v924, %v1357
        %v1390 = vld [vmem:[%s6] sm:$0xf]
        %v1391 = vld [vmem:[%s7] sm:$0x1]
        %v1393 = vperm.slane %v1391, 0
        %1396 = vset.pattern.permute.xlu0 0
        %1397 = vperm.xlu0 %1396, %v1374
        %v1398 = vpop.permute.xlu0 %1397
        %1401 = vset.pattern.permute.xlu0 0
        %1402 = vperm.xlu0 %1401, %v1375
        %v1403 = vpop.permute.xlu0 %1402
        %1406 = vset.pattern.permute.xlu0 0
        %1407 = vperm.xlu0 %1406, %v1376
        %v1408 = vpop.permute.xlu0 %1407
        %1411 = vset.pattern.permute.xlu0 0
        %1412 = vperm.xlu0 %1411, %v1377
        %v1413 = vpop.permute.xlu0 %1412
        %1416 = vset.pattern.permute.xlu0 0
        %1417 = vperm.xlu0 %1416, %v1378
        %v1418 = vpop.permute.xlu0 %1417
        %1421 = vset.pattern.permute.xlu0 0
        %1422 = vperm.xlu0 %1421, %v1379
        %v1423 = vpop.permute.xlu0 %1422
        %1426 = vset.pattern.permute.xlu0 0
        %1427 = vperm.xlu0 %1426, %v1380
        %v1428 = vpop.permute.xlu0 %1427
        %1431 = vset.pattern.permute.xlu0 0
        %1432 = vperm.xlu0 %1431, %v1381
        %v1433 = vpop.permute.xlu0 %1432
        %1436 = vset.pattern.permute.xlu0 0
        %1437 = vperm.xlu0 %1436, %v1382
        %v1438 = vpop.permute.xlu0 %1437
        %1441 = vset.pattern.permute.xlu0 0
        %1442 = vperm.xlu0 %1441, %v1383
        %v1443 = vpop.permute.xlu0 %1442
        %1446 = vset.pattern.permute.xlu0 0
        %1447 = vperm.xlu0 %1446, %v1384
        %v1448 = vpop.permute.xlu0 %1447
        %1451 = vset.pattern.permute.xlu0 0
        %1452 = vperm.xlu0 %1451, %v1385
        %v1453 = vpop.permute.xlu0 %1452
        %1456 = vset.pattern.permute.xlu0 0
        %1457 = vperm.xlu0 %1456, %v1386
        %v1458 = vpop.permute.xlu0 %1457
        %1461 = vset.pattern.permute.xlu0 0
        %1462 = vperm.xlu0 %1461, %v1387
        %v1463 = vpop.permute.xlu0 %1462
        %1466 = vset.pattern.permute.xlu0 0
        %1467 = vperm.xlu0 %1466, %v1388
        %v1468 = vpop.permute.xlu0 %1467
        %1471 = vset.pattern.permute.xlu0 0
        %1472 = vperm.xlu0 %1471, %v1389
        %v1473 = vpop.permute.xlu0 %1472
        %v1475 = vperm.slane %v1390, 0
        %v1476 = vmul.f32 %v1398, %v1475
        %v1477 = vmul.f32 %v1403, %v1475
        %v1478 = vmul.f32 %v1408, %v1475
        %v1479 = vmul.f32 %v1413, %v1475
        %v1480 = vmul.f32 %v1418, %v1475
        %v1481 = vmul.f32 %v1423, %v1475
        %v1482 = vmul.f32 %v1428, %v1475
        %v1483 = vmul.f32 %v1433, %v1475
        %v1484 = vmul.f32 %v1438, %v1475
        %v1485 = vmul.f32 %v1443, %v1475
        %v1486 = vmul.f32 %v1448, %v1475
        %v1487 = vmul.f32 %v1453, %v1475
        %v1488 = vmul.f32 %v1458, %v1475
        %v1489 = vmul.f32 %v1463, %v1475
        %v1490 = vmul.f32 %v1468, %v1475
        %v1491 = vmul.f32 %v1473, %v1475
        %v1492 = vadd.f32 %v1393, %v1476
        %v1493 = vadd.f32 %v1393, %v1477
        %v1494 = vadd.f32 %v1393, %v1478
        %v1495 = vadd.f32 %v1393, %v1479
        %v1496 = vadd.f32 %v1393, %v1480
        %v1497 = vadd.f32 %v1393, %v1481
        %v1498 = vadd.f32 %v1393, %v1482
        %v1499 = vadd.f32 %v1393, %v1483
        %v1500 = vadd.f32 %v1393, %v1484
        %v1501 = vadd.f32 %v1393, %v1485
        %v1502 = vadd.f32 %v1393, %v1486
        %v1503 = vadd.f32 %v1393, %v1487
        %v1504 = vadd.f32 %v1393, %v1488
        %v1505 = vadd.f32 %v1393, %v1489
        %v1506 = vadd.f32 %v1393, %v1490
        %v1507 = vadd.f32 %v1393, %v1491
        %1508 = vset.pattern.permute.xlu0 1
        %1509 = vperm.xlu0 %1508, %v1374
        %v1510 = vpop.permute.xlu0 %1509
        %1512 = vset.pattern.permute.xlu0 1
        %1513 = vperm.xlu0 %1512, %v1375
        %v1514 = vpop.permute.xlu0 %1513
        %1516 = vset.pattern.permute.xlu0 1
        %1517 = vperm.xlu0 %1516, %v1376
        %v1518 = vpop.permute.xlu0 %1517
        %1520 = vset.pattern.permute.xlu0 1
        %1521 = vperm.xlu0 %1520, %v1377
        %v1522 = vpop.permute.xlu0 %1521
        %1524 = vset.pattern.permute.xlu0 1
        %1525 = vperm.xlu0 %1524, %v1378
        %v1526 = vpop.permute.xlu0 %1525
        %1528 = vset.pattern.permute.xlu0 1
        %1529 = vperm.xlu0 %1528, %v1379
        %v1530 = vpop.permute.xlu0 %1529
        %1532 = vset.pattern.permute.xlu0 1
        %1533 = vperm.xlu0 %1532, %v1380
        %v1534 = vpop.permute.xlu0 %1533
        %1536 = vset.pattern.permute.xlu0 1
        %1537 = vperm.xlu0 %1536, %v1381
        %v1538 = vpop.permute.xlu0 %1537
        %1540 = vset.pattern.permute.xlu0 1
        %1541 = vperm.xlu0 %1540, %v1382
        %v1542 = vpop.permute.xlu0 %1541
        %1544 = vset.pattern.permute.xlu0 1
        %1545 = vperm.xlu0 %1544, %v1383
        %v1546 = vpop.permute.xlu0 %1545
        %1548 = vset.pattern.permute.xlu0 1
        %1549 = vperm.xlu0 %1548, %v1384
        %v1550 = vpop.permute.xlu0 %1549
        %1552 = vset.pattern.permute.xlu0 1
        %1553 = vperm.xlu0 %1552, %v1385
        %v1554 = vpop.permute.xlu0 %1553
        %1556 = vset.pattern.permute.xlu0 1
        %1557 = vperm.xlu0 %1556, %v1386
        %v1558 = vpop.permute.xlu0 %1557
        %1560 = vset.pattern.permute.xlu0 1
        %1561 = vperm.xlu0 %1560, %v1387
        %v1562 = vpop.permute.xlu0 %1561
        %1564 = vset.pattern.permute.xlu0 1
        %1565 = vperm.xlu0 %1564, %v1388
        %v1566 = vpop.permute.xlu0 %1565
        %1568 = vset.pattern.permute.xlu0 1
        %1569 = vperm.xlu0 %1568, %v1389
        %v1570 = vpop.permute.xlu0 %1569
        %v1572 = vperm.slane %v1390, 1
        %v1573 = vmul.f32 %v1510, %v1572
        %v1574 = vmul.f32 %v1514, %v1572
        %v1575 = vmul.f32 %v1518, %v1572
        %v1576 = vmul.f32 %v1522, %v1572
        %v1577 = vmul.f32 %v1526, %v1572
        %v1578 = vmul.f32 %v1530, %v1572
        %v1579 = vmul.f32 %v1534, %v1572
        %v1580 = vmul.f32 %v1538, %v1572
        %v1581 = vmul.f32 %v1542, %v1572
        %v1582 = vmul.f32 %v1546, %v1572
        %v1583 = vmul.f32 %v1550, %v1572
        %v1584 = vmul.f32 %v1554, %v1572
        %v1585 = vmul.f32 %v1558, %v1572
        %v1586 = vmul.f32 %v1562, %v1572
        %v1587 = vmul.f32 %v1566, %v1572
        %v1588 = vmul.f32 %v1570, %v1572
        %v1589 = vadd.f32 %v1492, %v1573
        %v1590 = vadd.f32 %v1493, %v1574
        %v1591 = vadd.f32 %v1494, %v1575
        %v1592 = vadd.f32 %v1495, %v1576
        %v1593 = vadd.f32 %v1496, %v1577
        %v1594 = vadd.f32 %v1497, %v1578
        %v1595 = vadd.f32 %v1498, %v1579
        %v1596 = vadd.f32 %v1499, %v1580
        %v1597 = vadd.f32 %v1500, %v1581
        %v1598 = vadd.f32 %v1501, %v1582
        %v1599 = vadd.f32 %v1502, %v1583
        %v1600 = vadd.f32 %v1503, %v1584
        %v1601 = vadd.f32 %v1504, %v1585
        %v1602 = vadd.f32 %v1505, %v1586
        %v1603 = vadd.f32 %v1506, %v1587
        %v1604 = vadd.f32 %v1507, %v1588
        %1605 = vset.pattern.permute.xlu0 2
        %1606 = vperm.xlu0 %1605, %v1374
        %v1607 = vpop.permute.xlu0 %1606
        %1609 = vset.pattern.permute.xlu0 2
        %1610 = vperm.xlu0 %1609, %v1375
        %v1611 = vpop.permute.xlu0 %1610
        %1613 = vset.pattern.permute.xlu0 2
        %1614 = vperm.xlu0 %1613, %v1376
        %v1615 = vpop.permute.xlu0 %1614
        %1617 = vset.pattern.permute.xlu0 2
        %1618 = vperm.xlu0 %1617, %v1377
        %v1619 = vpop.permute.xlu0 %1618
        %1621 = vset.pattern.permute.xlu0 2
        %1622 = vperm.xlu0 %1621, %v1378
        %v1623 = vpop.permute.xlu0 %1622
        %1625 = vset.pattern.permute.xlu0 2
        %1626 = vperm.xlu0 %1625, %v1379
        %v1627 = vpop.permute.xlu0 %1626
        %1629 = vset.pattern.permute.xlu0 2
        %1630 = vperm.xlu0 %1629, %v1380
        %v1631 = vpop.permute.xlu0 %1630
        %1633 = vset.pattern.permute.xlu0 2
        %1634 = vperm.xlu0 %1633, %v1381
        %v1635 = vpop.permute.xlu0 %1634
        %1637 = vset.pattern.permute.xlu0 2
        %1638 = vperm.xlu0 %1637, %v1382
        %v1639 = vpop.permute.xlu0 %1638
        %1641 = vset.pattern.permute.xlu0 2
        %1642 = vperm.xlu0 %1641, %v1383
        %v1643 = vpop.permute.xlu0 %1642
        %1645 = vset.pattern.permute.xlu0 2
        %1646 = vperm.xlu0 %1645, %v1384
        %v1647 = vpop.permute.xlu0 %1646
        %1649 = vset.pattern.permute.xlu0 2
        %1650 = vperm.xlu0 %1649, %v1385
        %v1651 = vpop.permute.xlu0 %1650
        %1653 = vset.pattern.permute.xlu0 2
        %1654 = vperm.xlu0 %1653, %v1386
        %v1655 = vpop.permute.xlu0 %1654
        %1657 = vset.pattern.permute.xlu0 2
        %1658 = vperm.xlu0 %1657, %v1387
        %v1659 = vpop.permute.xlu0 %1658
        %1661 = vset.pattern.permute.xlu0 2
        %1662 = vperm.xlu0 %1661, %v1388
        %v1663 = vpop.permute.xlu0 %1662
        %1665 = vset.pattern.permute.xlu0 2
        %1666 = vperm.xlu0 %1665, %v1389
        %v1667 = vpop.permute.xlu0 %1666
        %v1669 = vperm.slane %v1390, 2
        %v1670 = vmul.f32 %v1607, %v1669
        %v1671 = vmul.f32 %v1611, %v1669
        %v1672 = vmul.f32 %v1615, %v1669
        %v1673 = vmul.f32 %v1619, %v1669
        %v1674 = vmul.f32 %v1623, %v1669
        %v1675 = vmul.f32 %v1627, %v1669
        %v1676 = vmul.f32 %v1631, %v1669
        %v1677 = vmul.f32 %v1635, %v1669
        %v1678 = vmul.f32 %v1639, %v1669
        %v1679 = vmul.f32 %v1643, %v1669
        %v1680 = vmul.f32 %v1647, %v1669
        %v1681 = vmul.f32 %v1651, %v1669
        %v1682 = vmul.f32 %v1655, %v1669
        %v1683 = vmul.f32 %v1659, %v1669
        %v1684 = vmul.f32 %v1663, %v1669
        %v1685 = vmul.f32 %v1667, %v1669
        %v1686 = vadd.f32 %v1589, %v1670
        %v1687 = vadd.f32 %v1590, %v1671
        %v1688 = vadd.f32 %v1591, %v1672
        %v1689 = vadd.f32 %v1592, %v1673
        %v1690 = vadd.f32 %v1593, %v1674
        %v1691 = vadd.f32 %v1594, %v1675
        %v1692 = vadd.f32 %v1595, %v1676
        %v1693 = vadd.f32 %v1596, %v1677
        %v1694 = vadd.f32 %v1597, %v1678
        %v1695 = vadd.f32 %v1598, %v1679
        %v1696 = vadd.f32 %v1599, %v1680
        %v1697 = vadd.f32 %v1600, %v1681
        %v1698 = vadd.f32 %v1601, %v1682
        %v1699 = vadd.f32 %v1602, %v1683
        %v1700 = vadd.f32 %v1603, %v1684
        %v1701 = vadd.f32 %v1604, %v1685
        %1702 = vset.pattern.permute.xlu0 3
        %1703 = vperm.xlu0 %1702, %v1374
        %v1704 = vpop.permute.xlu0 %1703
        %1706 = vset.pattern.permute.xlu0 3
        %1707 = vperm.xlu0 %1706, %v1375
        %v1708 = vpop.permute.xlu0 %1707
        %1710 = vset.pattern.permute.xlu0 3
        %1711 = vperm.xlu0 %1710, %v1376
        %v1712 = vpop.permute.xlu0 %1711
        %1714 = vset.pattern.permute.xlu0 3
        %1715 = vperm.xlu0 %1714, %v1377
        %v1716 = vpop.permute.xlu0 %1715
        %1718 = vset.pattern.permute.xlu0 3
        %1719 = vperm.xlu0 %1718, %v1378
        %v1720 = vpop.permute.xlu0 %1719
        %1722 = vset.pattern.permute.xlu0 3
        %1723 = vperm.xlu0 %1722, %v1379
        %v1724 = vpop.permute.xlu0 %1723
        %1726 = vset.pattern.permute.xlu0 3
        %1727 = vperm.xlu0 %1726, %v1380
        %v1728 = vpop.permute.xlu0 %1727
        %1730 = vset.pattern.permute.xlu0 3
        %1731 = vperm.xlu0 %1730, %v1381
        %v1732 = vpop.permute.xlu0 %1731
        %1734 = vset.pattern.permute.xlu0 3
        %1735 = vperm.xlu0 %1734, %v1382
        %v1736 = vpop.permute.xlu0 %1735
        %1738 = vset.pattern.permute.xlu0 3
        %1739 = vperm.xlu0 %1738, %v1383
        %v1740 = vpop.permute.xlu0 %1739
        %1742 = vset.pattern.permute.xlu0 3
        %1743 = vperm.xlu0 %1742, %v1384
        %v1744 = vpop.permute.xlu0 %1743
        %1746 = vset.pattern.permute.xlu0 3
        %1747 = vperm.xlu0 %1746, %v1385
        %v1748 = vpop.permute.xlu0 %1747
        %1750 = vset.pattern.permute.xlu0 3
        %1751 = vperm.xlu0 %1750, %v1386
        %v1752 = vpop.permute.xlu0 %1751
        %1754 = vset.pattern.permute.xlu0 3
        %1755 = vperm.xlu0 %1754, %v1387
        %v1756 = vpop.permute.xlu0 %1755
        %1758 = vset.pattern.permute.xlu0 3
        %1759 = vperm.xlu0 %1758, %v1388
        %v1760 = vpop.permute.xlu0 %1759
        %1762 = vset.pattern.permute.xlu0 3
        %1763 = vperm.xlu0 %1762, %v1389
        %v1764 = vpop.permute.xlu0 %1763
        %v1766 = vperm.slane %v1390, 3
        %v1767 = vmul.f32 %v1704, %v1766
        %v1768 = vmul.f32 %v1708, %v1766
        %v1769 = vmul.f32 %v1712, %v1766
        %v1770 = vmul.f32 %v1716, %v1766
        %v1771 = vmul.f32 %v1720, %v1766
        %v1772 = vmul.f32 %v1724, %v1766
        %v1773 = vmul.f32 %v1728, %v1766
        %v1774 = vmul.f32 %v1732, %v1766
        %v1775 = vmul.f32 %v1736, %v1766
        %v1776 = vmul.f32 %v1740, %v1766
        %v1777 = vmul.f32 %v1744, %v1766
        %v1778 = vmul.f32 %v1748, %v1766
        %v1779 = vmul.f32 %v1752, %v1766
        %v1780 = vmul.f32 %v1756, %v1766
        %v1781 = vmul.f32 %v1760, %v1766
        %v1782 = vmul.f32 %v1764, %v1766
        %v1783 = vadd.f32 %v1686, %v1767
        %v1784 = vadd.f32 %v1687, %v1768
        %v1785 = vadd.f32 %v1688, %v1769
        %v1786 = vadd.f32 %v1689, %v1770
        %v1787 = vadd.f32 %v1690, %v1771
        %v1788 = vadd.f32 %v1691, %v1772
        %v1789 = vadd.f32 %v1692, %v1773
        %v1790 = vadd.f32 %v1693, %v1774
        %v1791 = vadd.f32 %v1694, %v1775
        %v1792 = vadd.f32 %v1695, %v1776
        %v1793 = vadd.f32 %v1696, %v1777
        %v1794 = vadd.f32 %v1697, %v1778
        %v1795 = vadd.f32 %v1698, %v1779
        %v1796 = vadd.f32 %v1699, %v1780
        %v1797 = vadd.f32 %v1700, %v1781
        %v1798 = vadd.f32 %v1701, %v1782
        %v1799 = vtanh.pop %v1783
        %v1800 = vtanh.pop %v1784
        %v1801 = vtanh.pop %v1785
        %v1802 = vtanh.pop %v1786
        %v1803 = vtanh.pop %v1787
        %v1804 = vtanh.pop %v1788
        %v1805 = vtanh.pop %v1789
        %v1806 = vtanh.pop %v1790
        %v1807 = vtanh.pop %v1791
        %v1808 = vtanh.pop %v1792
        %v1809 = vtanh.pop %v1793
        %v1810 = vtanh.pop %v1794
        %v1811 = vtanh.pop %v1795
        %v1812 = vtanh.pop %v1796
        %v1813 = vtanh.pop %v1797
        %v1814 = vtanh.pop %v1798
        %v1815 = vpack.c.bf16 %v1800, %v1799
        %v1816 = vpack.c.bf16 %v1802, %v1801
        %v1817 = vpack.c.bf16 %v1804, %v1803
        %v1818 = vpack.c.bf16 %v1806, %v1805
        %v1819 = vpack.c.bf16 %v1808, %v1807
        %v1820 = vpack.c.bf16 %v1810, %v1809
        %v1821 = vpack.c.bf16 %v1812, %v1811
        %v1822 = vpack.c.bf16 %v1814, %v1813
        %v1823 = vld [vmem:[#allocation5] sm:$0xff]
        %v1824 = vld [vmem:[#allocation5 + $0x8] sm:$0xff]
        %v1825 = vld [vmem:[#allocation5 + $0x10] sm:$0xff]
        %v1826 = vld [vmem:[#allocation5 + $0x18] sm:$0xff]
        %v1827 = vld [vmem:[#allocation5 + $0x20] sm:$0xff]
        %v1828 = vld [vmem:[#allocation5 + $0x28] sm:$0xff]
        %v1829 = vld [vmem:[#allocation5 + $0x30] sm:$0xff]
        %v1830 = vld [vmem:[#allocation5 + $0x38] sm:$0xff]
        %v1831 = vld [vmem:[#allocation5 + $0x40] sm:$0xff]
        %v1832 = vld [vmem:[#allocation5 + $0x48] sm:$0xff]
        %v1833 = vld [vmem:[#allocation5 + $0x50] sm:$0xff]
        %v1834 = vld [vmem:[#allocation5 + $0x58] sm:$0xff]
        %v1835 = vld [vmem:[#allocation5 + $0x60] sm:$0xff]
        %v1836 = vld [vmem:[#allocation5 + $0x68] sm:$0xff]
        %v1837 = vld [vmem:[#allocation5 + $0x70] sm:$0xff]
        %v1838 = vld [vmem:[#allocation5 + $0x78] sm:$0xff]
        %v1839 = vld [vmem:[%s9] sm:$0x3]
        %v1841 = vperm.slane %v1839, 0
        %v1842 = vperm.slane %v1839, 1
        %v1861 = vunpack.c.l.b16 %v1823
        %v1862 = vunpack.c.h.b16 %v1823
        %v1863 = vunpack.c.l.b16 %v1824
        %v1864 = vunpack.c.h.b16 %v1824
        %v1865 = vunpack.c.l.b16 %v1825
        %v1866 = vunpack.c.h.b16 %v1825
        %v1867 = vunpack.c.l.b16 %v1826
        %v1868 = vunpack.c.h.b16 %v1826
        %v1869 = vunpack.c.l.b16 %v1827
        %v1870 = vunpack.c.h.b16 %v1827
        %v1871 = vunpack.c.l.b16 %v1828
        %v1872 = vunpack.c.h.b16 %v1828
        %v1873 = vunpack.c.l.b16 %v1829
        %v1874 = vunpack.c.h.b16 %v1829
        %v1875 = vunpack.c.l.b16 %v1830
        %v1876 = vunpack.c.h.b16 %v1830
        %v1877 = vunpack.c.l.b16 %v1831
        %v1878 = vunpack.c.h.b16 %v1831
        %v1879 = vunpack.c.l.b16 %v1832
        %v1880 = vunpack.c.h.b16 %v1832
        %v1881 = vunpack.c.l.b16 %v1833
        %v1882 = vunpack.c.h.b16 %v1833
        %v1883 = vunpack.c.l.b16 %v1834
        %v1884 = vunpack.c.h.b16 %v1834
        %v1885 = vunpack.c.l.b16 %v1835
        %v1886 = vunpack.c.h.b16 %v1835
        %v1887 = vunpack.c.l.b16 %v1836
        %v1888 = vunpack.c.h.b16 %v1836
        %v1889 = vunpack.c.l.b16 %v1837
        %v1890 = vunpack.c.h.b16 %v1837
        %v1891 = vunpack.c.l.b16 %v1838
        %v1892 = vunpack.c.h.b16 %v1838
        %v1893 = vpack.c.b16 %v1863, %v1861
        %v1894 = vpack.c.b16 %v1864, %v1862
        %v1895 = vpack.c.b16 %v1867, %v1865
        %v1896 = vpack.c.b16 %v1868, %v1866
        %v1897 = vpack.c.b16 %v1871, %v1869
        %v1898 = vpack.c.b16 %v1872, %v1870
        %v1899 = vpack.c.b16 %v1875, %v1873
        %v1900 = vpack.c.b16 %v1876, %v1874
        %v1901 = vpack.c.b16 %v1879, %v1877
        %v1902 = vpack.c.b16 %v1880, %v1878
        %v1903 = vpack.c.b16 %v1883, %v1881
        %v1904 = vpack.c.b16 %v1884, %v1882
        %v1905 = vpack.c.b16 %v1887, %v1885
        %v1906 = vpack.c.b16 %v1888, %v1886
        %v1907 = vpack.c.b16 %v1891, %v1889
        %v1908 = vpack.c.b16 %v1892, %v1890
        %1925 = vmatpush.bf16.msra.mxu0 %v1907
        %1926 = vmatpush.bf16.msra.mxu0 %v1905
        %1927 = vmatpush.bf16.msra.mxu0 %v1903
        %1928 = vmatpush.bf16.msra.mxu0 %v1901
        %1929 = vmatpush.bf16.msra.mxu0 %v1899
        %1930 = vmatpush.bf16.msra.mxu0 %v1897
        %1931 = vmatpush.bf16.msra.mxu0 %v1895
        %1932 = vmatpush.bf16.msra.mxu0 %v1893
        %1933 = vmatmul.bf16.gmra.mxu0 %v1815
        %v1934 = vpop.f32.mrf.mxu0
        %v1935 = vadd.f32 %v1841, %v1934
        %v1936 = vpop.f32.mrf.mxu0
        %v1937 = vadd.f32 %v1841, %v1936
        %1938 = vmatmul.bf16.gmra.mxu0 %v1816
        %v1939 = vpop.f32.mrf.mxu0
        %v1940 = vadd.f32 %v1841, %v1939
        %v1941 = vpop.f32.mrf.mxu0
        %v1942 = vadd.f32 %v1841, %v1941
        %1943 = vmatmul.bf16.gmra.mxu0 %v1817
        %v1944 = vpop.f32.mrf.mxu0
        %v1945 = vadd.f32 %v1841, %v1944
        %v1946 = vpop.f32.mrf.mxu0
        %v1947 = vadd.f32 %v1841, %v1946
        %1948 = vmatmul.bf16.gmra.mxu0 %v1818
        %v1949 = vpop.f32.mrf.mxu0
        %v1950 = vadd.f32 %v1841, %v1949
        %v1951 = vpop.f32.mrf.mxu0
        %v1952 = vadd.f32 %v1841, %v1951
        %1953 = vmatmul.bf16.gmra.mxu0 %v1819
        %v1954 = vpop.f32.mrf.mxu0
        %v1955 = vadd.f32 %v1841, %v1954
        %v1956 = vpop.f32.mrf.mxu0
        %v1957 = vadd.f32 %v1841, %v1956
        %1958 = vmatmul.bf16.gmra.mxu0 %v1820
        %v1959 = vpop.f32.mrf.mxu0
        %v1960 = vadd.f32 %v1841, %v1959
        %v1961 = vpop.f32.mrf.mxu0
        %v1962 = vadd.f32 %v1841, %v1961
        %1963 = vmatmul.bf16.gmra.mxu0 %v1821
        %v1964 = vpop.f32.mrf.mxu0
        %v1965 = vadd.f32 %v1841, %v1964
        %v1966 = vpop.f32.mrf.mxu0
        %v1967 = vadd.f32 %v1841, %v1966
        %1968 = vmatmul.bf16.gmra.mxu0 %v1822
        %v1969 = vpop.f32.mrf.mxu0
        %v1970 = vadd.f32 %v1841, %v1969
        %v1971 = vpop.f32.mrf.mxu0
        %v1972 = vadd.f32 %v1841, %v1971
        %1973 = vdwg.mxu0
        %1974 = vmatpush.bf16.msra.mxu0 %v1908
        %1975 = vmatpush.bf16.msra.mxu0 %v1906
        %1976 = vmatpush.bf16.msra.mxu0 %v1904
        %1977 = vmatpush.bf16.msra.mxu0 %v1902
        %1978 = vmatpush.bf16.msra.mxu0 %v1900
        %1979 = vmatpush.bf16.msra.mxu0 %v1898
        %1980 = vmatpush.bf16.msra.mxu0 %v1896
        %1981 = vmatpush.bf16.msra.mxu0 %v1894
        %1982 = vmatmul.bf16.gmra.mxu0 %v1815
        %v1983 = vpop.f32.mrf.mxu0
        %v1984 = vadd.f32 %v1842, %v1983
        %v1985 = vpop.f32.mrf.mxu0
        %v1986 = vadd.f32 %v1842, %v1985
        %1987 = vmatmul.bf16.gmra.mxu0 %v1816
        %v1988 = vpop.f32.mrf.mxu0
        %v1989 = vadd.f32 %v1842, %v1988
        %v1990 = vpop.f32.mrf.mxu0
        %v1991 = vadd.f32 %v1842, %v1990
        %1992 = vmatmul.bf16.gmra.mxu0 %v1817
        %v1993 = vpop.f32.mrf.mxu0
        %v1994 = vadd.f32 %v1842, %v1993
        %v1995 = vpop.f32.mrf.mxu0
        %v1996 = vadd.f32 %v1842, %v1995
        %1997 = vmatmul.bf16.gmra.mxu0 %v1818
        %v1998 = vpop.f32.mrf.mxu0
        %v1999 = vadd.f32 %v1842, %v1998
        %v2000 = vpop.f32.mrf.mxu0
        %v2001 = vadd.f32 %v1842, %v2000
        %2002 = vmatmul.bf16.gmra.mxu0 %v1819
        %v2003 = vpop.f32.mrf.mxu0
        %v2004 = vadd.f32 %v1842, %v2003
        %v2005 = vpop.f32.mrf.mxu0
        %v2006 = vadd.f32 %v1842, %v2005
        %2007 = vmatmul.bf16.gmra.mxu0 %v1820
        %v2008 = vpop.f32.mrf.mxu0
        %v2009 = vadd.f32 %v1842, %v2008
        %v2010 = vpop.f32.mrf.mxu0
        %v2011 = vadd.f32 %v1842, %v2010
        %2012 = vmatmul.bf16.gmra.mxu0 %v1821
        %v2013 = vpop.f32.mrf.mxu0
        %v2014 = vadd.f32 %v1842, %v2013
        %v2015 = vpop.f32.mrf.mxu0
        %v2016 = vadd.f32 %v1842, %v2015
        %2017 = vmatmul.bf16.gmra.mxu0 %v1822
        %v2018 = vpop.f32.mrf.mxu0
        %v2019 = vadd.f32 %v1842, %v2018
        %v2020 = vpop.f32.mrf.mxu0
        %v2021 = vadd.f32 %v1842, %v2020
        %2022 = vdwg.mxu0
        %v2023 = vxor.u32 %v1935, 2147483648
        %v2024 = vxor.u32 %v1984, 2147483648
        %v2025 = vxor.u32 %v1937, 2147483648
        %v2026 = vxor.u32 %v1986, 2147483648
        %v2027 = vxor.u32 %v1940, 2147483648
        %v2028 = vxor.u32 %v1989, 2147483648
        %v2029 = vxor.u32 %v1942, 2147483648
        %v2030 = vxor.u32 %v1991, 2147483648
        %v2031 = vxor.u32 %v1945, 2147483648
        %v2032 = vxor.u32 %v1994, 2147483648
        %v2033 = vxor.u32 %v1947, 2147483648
        %v2034 = vxor.u32 %v1996, 2147483648
        %v2035 = vxor.u32 %v1950, 2147483648
        %v2036 = vxor.u32 %v1999, 2147483648
        %v2037 = vxor.u32 %v1952, 2147483648
        %v2038 = vxor.u32 %v2001, 2147483648
        %v2039 = vxor.u32 %v1955, 2147483648
        %v2040 = vxor.u32 %v2004, 2147483648
        %v2041 = vxor.u32 %v1957, 2147483648
        %v2042 = vxor.u32 %v2006, 2147483648
        %v2043 = vxor.u32 %v1960, 2147483648
        %v2044 = vxor.u32 %v2009, 2147483648
        %v2045 = vxor.u32 %v1962, 2147483648
        %v2046 = vxor.u32 %v2011, 2147483648
        %v2047 = vxor.u32 %v1965, 2147483648
        %v2048 = vxor.u32 %v2014, 2147483648
        %v2049 = vxor.u32 %v1967, 2147483648
        %v2050 = vxor.u32 %v2016, 2147483648
        %v2051 = vxor.u32 %v1970, 2147483648
        %v2052 = vxor.u32 %v2019, 2147483648
        %v2053 = vxor.u32 %v1972, 2147483648
        %v2054 = vxor.u32 %v2021, 2147483648
        %v2055 = vmul.f32 %v2023, 1.442695
        %v2056 = vpow.pop %v2055
        %v2057 = vmul.f32 %v2024, 1.442695
        %v2058 = vpow.pop %v2057
        %v2059 = vmul.f32 %v2025, 1.442695
        %v2060 = vpow.pop %v2059
        %v2061 = vmul.f32 %v2026, 1.442695
        %v2062 = vpow.pop %v2061
        %v2063 = vmul.f32 %v2027, 1.442695
        %v2064 = vpow.pop %v2063
        %v2065 = vmul.f32 %v2028, 1.442695
        %v2066 = vpow.pop %v2065
        %v2067 = vmul.f32 %v2029, 1.442695
        %v2068 = vpow.pop %v2067
        %v2069 = vmul.f32 %v2030, 1.442695
        %v2070 = vpow.pop %v2069
        %v2071 = vmul.f32 %v2031, 1.442695
        %v2072 = vpow.pop %v2071
        %v2073 = vmul.f32 %v2032, 1.442695
        %v2074 = vpow.pop %v2073
        %v2075 = vmul.f32 %v2033, 1.442695
        %v2076 = vpow.pop %v2075
        %v2077 = vmul.f32 %v2034, 1.442695
        %v2078 = vpow.pop %v2077
        %v2079 = vmul.f32 %v2035, 1.442695
        %v2080 = vpow.pop %v2079
        %v2081 = vmul.f32 %v2036, 1.442695
        %v2082 = vpow.pop %v2081
        %v2083 = vmul.f32 %v2037, 1.442695
        %v2084 = vpow.pop %v2083
        %v2085 = vmul.f32 %v2038, 1.442695
        %v2086 = vpow.pop %v2085
        %v2087 = vmul.f32 %v2039, 1.442695
        %v2088 = vpow.pop %v2087
        %v2089 = vmul.f32 %v2040, 1.442695
        %v2090 = vpow.pop %v2089
        %v2091 = vmul.f32 %v2041, 1.442695
        %v2092 = vpow.pop %v2091
        %v2093 = vmul.f32 %v2042, 1.442695
        %v2094 = vpow.pop %v2093
        %v2095 = vmul.f32 %v2043, 1.442695
        %v2096 = vpow.pop %v2095
        %v2097 = vmul.f32 %v2044, 1.442695
        %v2098 = vpow.pop %v2097
        %v2099 = vmul.f32 %v2045, 1.442695
        %v2100 = vpow.pop %v2099
        %v2101 = vmul.f32 %v2046, 1.442695
        %v2102 = vpow.pop %v2101
        %v2103 = vmul.f32 %v2047, 1.442695
        %v2104 = vpow.pop %v2103
        %v2105 = vmul.f32 %v2048, 1.442695
        %v2106 = vpow.pop %v2105
        %v2107 = vmul.f32 %v2049, 1.442695
        %v2108 = vpow.pop %v2107
        %v2109 = vmul.f32 %v2050, 1.442695
        %v2110 = vpow.pop %v2109
        %v2111 = vmul.f32 %v2051, 1.442695
        %v2112 = vpow.pop %v2111
        %v2113 = vmul.f32 %v2052, 1.442695
        %v2114 = vpow.pop %v2113
        %v2115 = vmul.f32 %v2053, 1.442695
        %v2116 = vpow.pop %v2115
        %v2117 = vmul.f32 %v2054, 1.442695
        %v2118 = vpow.pop %v2117
        %v2119 = vadd.f32 %v2056, 1.0
        %v2120 = vadd.f32 %v2058, 1.0
        %v2121 = vadd.f32 %v2060, 1.0
        %v2122 = vadd.f32 %v2062, 1.0
        %v2123 = vadd.f32 %v2064, 1.0
        %v2124 = vadd.f32 %v2066, 1.0
        %v2125 = vadd.f32 %v2068, 1.0
        %v2126 = vadd.f32 %v2070, 1.0
        %v2127 = vadd.f32 %v2072, 1.0
        %v2128 = vadd.f32 %v2074, 1.0
        %v2129 = vadd.f32 %v2076, 1.0
        %v2130 = vadd.f32 %v2078, 1.0
        %v2131 = vadd.f32 %v2080, 1.0
        %v2132 = vadd.f32 %v2082, 1.0
        %v2133 = vadd.f32 %v2084, 1.0
        %v2134 = vadd.f32 %v2086, 1.0
        %v2135 = vadd.f32 %v2088, 1.0
        %v2136 = vadd.f32 %v2090, 1.0
        %v2137 = vadd.f32 %v2092, 1.0
        %v2138 = vadd.f32 %v2094, 1.0
        %v2139 = vadd.f32 %v2096, 1.0
        %v2140 = vadd.f32 %v2098, 1.0
        %v2141 = vadd.f32 %v2100, 1.0
        %v2142 = vadd.f32 %v2102, 1.0
        %v2143 = vadd.f32 %v2104, 1.0
        %v2144 = vadd.f32 %v2106, 1.0
        %v2145 = vadd.f32 %v2108, 1.0
        %v2146 = vadd.f32 %v2110, 1.0
        %v2147 = vadd.f32 %v2112, 1.0
        %v2148 = vadd.f32 %v2114, 1.0
        %v2149 = vadd.f32 %v2116, 1.0
        %v2150 = vadd.f32 %v2118, 1.0
        %v2151 = vrcp.pop %v2119
        %v2152 = vmul.f32 %v2119, %v2151
        %v2153 = vsub.f32 1.0, %v2152
        %v2154 = vmul.f32 %v2151, %v2153
        %v2155 = vadd.f32 %v2151, %v2154
        %vm2156 = vweird.f32 %v2119
        %vm2157 = vweird.f32 %v2151
        %vm2158 = vmor %vm2156, %vm2157
        %v2159 = vsel %vm2158, %v2151, %v2155
        %v2160 = vand.u32 2147483647, %v2119
        %vm2161 = vcmp.eq.f32.partialorder %v2160, 8.507059e+37
        %v2162 = vand.u32 %v2119, 2147483648
        %v2163 = vor.u32 1.1754944e-38, %v2162
        %v2164 = vsel %vm2161, %v2163, %v2159
        %v2165 = vmul.f32 1.0, %v2164
        %v2166 = vrcp.pop %v2120
        %v2167 = vmul.f32 %v2120, %v2166
        %v2168 = vsub.f32 1.0, %v2167
        %v2169 = vmul.f32 %v2166, %v2168
        %v2170 = vadd.f32 %v2166, %v2169
        %vm2171 = vweird.f32 %v2120
        %vm2172 = vweird.f32 %v2166
        %vm2173 = vmor %vm2171, %vm2172
        %v2174 = vsel %vm2173, %v2166, %v2170
        %v2175 = vand.u32 2147483647, %v2120
        %vm2176 = vcmp.eq.f32.partialorder %v2175, 8.507059e+37
        %v2177 = vand.u32 %v2120, 2147483648
        %v2178 = vor.u32 1.1754944e-38, %v2177
        %v2179 = vsel %vm2176, %v2178, %v2174
        %v2180 = vmul.f32 1.0, %v2179
        %v2181 = vrcp.pop %v2121
        %v2182 = vmul.f32 %v2121, %v2181
        %v2183 = vsub.f32 1.0, %v2182
        %v2184 = vmul.f32 %v2181, %v2183
        %v2185 = vadd.f32 %v2181, %v2184
        %vm2186 = vweird.f32 %v2121
        %vm2187 = vweird.f32 %v2181
        %vm2188 = vmor %vm2186, %vm2187
        %v2189 = vsel %vm2188, %v2181, %v2185
        %v2190 = vand.u32 2147483647, %v2121
        %vm2191 = vcmp.eq.f32.partialorder %v2190, 8.507059e+37
        %v2192 = vand.u32 %v2121, 2147483648
        %v2193 = vor.u32 1.1754944e-38, %v2192
        %v2194 = vsel %vm2191, %v2193, %v2189
        %v2195 = vmul.f32 1.0, %v2194
        %v2196 = vrcp.pop %v2122
        %v2197 = vmul.f32 %v2122, %v2196
        %v2198 = vsub.f32 1.0, %v2197
        %v2199 = vmul.f32 %v2196, %v2198
        %v2200 = vadd.f32 %v2196, %v2199
        %vm2201 = vweird.f32 %v2122
        %vm2202 = vweird.f32 %v2196
        %vm2203 = vmor %vm2201, %vm2202
        %v2204 = vsel %vm2203, %v2196, %v2200
        %v2205 = vand.u32 2147483647, %v2122
        %vm2206 = vcmp.eq.f32.partialorder %v2205, 8.507059e+37
        %v2207 = vand.u32 %v2122, 2147483648
        %v2208 = vor.u32 1.1754944e-38, %v2207
        %v2209 = vsel %vm2206, %v2208, %v2204
        %v2210 = vmul.f32 1.0, %v2209
        %v2211 = vrcp.pop %v2123
        %v2212 = vmul.f32 %v2123, %v2211
        %v2213 = vsub.f32 1.0, %v2212
        %v2214 = vmul.f32 %v2211, %v2213
        %v2215 = vadd.f32 %v2211, %v2214
        %vm2216 = vweird.f32 %v2123
        %vm2217 = vweird.f32 %v2211
        %vm2218 = vmor %vm2216, %vm2217
        %v2219 = vsel %vm2218, %v2211, %v2215
        %v2220 = vand.u32 2147483647, %v2123
        %vm2221 = vcmp.eq.f32.partialorder %v2220, 8.507059e+37
        %v2222 = vand.u32 %v2123, 2147483648
        %v2223 = vor.u32 1.1754944e-38, %v2222
        %v2224 = vsel %vm2221, %v2223, %v2219
        %v2225 = vmul.f32 1.0, %v2224
        %v2226 = vrcp.pop %v2124
        %v2227 = vmul.f32 %v2124, %v2226
        %v2228 = vsub.f32 1.0, %v2227
        %v2229 = vmul.f32 %v2226, %v2228
        %v2230 = vadd.f32 %v2226, %v2229
        %vm2231 = vweird.f32 %v2124
        %vm2232 = vweird.f32 %v2226
        %vm2233 = vmor %vm2231, %vm2232
        %v2234 = vsel %vm2233, %v2226, %v2230
        %v2235 = vand.u32 2147483647, %v2124
        %vm2236 = vcmp.eq.f32.partialorder %v2235, 8.507059e+37
        %v2237 = vand.u32 %v2124, 2147483648
        %v2238 = vor.u32 1.1754944e-38, %v2237
        %v2239 = vsel %vm2236, %v2238, %v2234
        %v2240 = vmul.f32 1.0, %v2239
        %v2241 = vrcp.pop %v2125
        %v2242 = vmul.f32 %v2125, %v2241
        %v2243 = vsub.f32 1.0, %v2242
        %v2244 = vmul.f32 %v2241, %v2243
        %v2245 = vadd.f32 %v2241, %v2244
        %vm2246 = vweird.f32 %v2125
        %vm2247 = vweird.f32 %v2241
        %vm2248 = vmor %vm2246, %vm2247
        %v2249 = vsel %vm2248, %v2241, %v2245
        %v2250 = vand.u32 2147483647, %v2125
        %vm2251 = vcmp.eq.f32.partialorder %v2250, 8.507059e+37
        %v2252 = vand.u32 %v2125, 2147483648
        %v2253 = vor.u32 1.1754944e-38, %v2252
        %v2254 = vsel %vm2251, %v2253, %v2249
        %v2255 = vmul.f32 1.0, %v2254
        %v2256 = vrcp.pop %v2126
        %v2257 = vmul.f32 %v2126, %v2256
        %v2258 = vsub.f32 1.0, %v2257
        %v2259 = vmul.f32 %v2256, %v2258
        %v2260 = vadd.f32 %v2256, %v2259
        %vm2261 = vweird.f32 %v2126
        %vm2262 = vweird.f32 %v2256
        %vm2263 = vmor %vm2261, %vm2262
        %v2264 = vsel %vm2263, %v2256, %v2260
        %v2265 = vand.u32 2147483647, %v2126
        %vm2266 = vcmp.eq.f32.partialorder %v2265, 8.507059e+37
        %v2267 = vand.u32 %v2126, 2147483648
        %v2268 = vor.u32 1.1754944e-38, %v2267
        %v2269 = vsel %vm2266, %v2268, %v2264
        %v2270 = vmul.f32 1.0, %v2269
        %v2271 = vrcp.pop %v2127
        %v2272 = vmul.f32 %v2127, %v2271
        %v2273 = vsub.f32 1.0, %v2272
        %v2274 = vmul.f32 %v2271, %v2273
        %v2275 = vadd.f32 %v2271, %v2274
        %vm2276 = vweird.f32 %v2127
        %vm2277 = vweird.f32 %v2271
        %vm2278 = vmor %vm2276, %vm2277
        %v2279 = vsel %vm2278, %v2271, %v2275
        %v2280 = vand.u32 2147483647, %v2127
        %vm2281 = vcmp.eq.f32.partialorder %v2280, 8.507059e+37
        %v2282 = vand.u32 %v2127, 2147483648
        %v2283 = vor.u32 1.1754944e-38, %v2282
        %v2284 = vsel %vm2281, %v2283, %v2279
        %v2285 = vmul.f32 1.0, %v2284
        %v2286 = vrcp.pop %v2128
        %v2287 = vmul.f32 %v2128, %v2286
        %v2288 = vsub.f32 1.0, %v2287
        %v2289 = vmul.f32 %v2286, %v2288
        %v2290 = vadd.f32 %v2286, %v2289
        %vm2291 = vweird.f32 %v2128
        %vm2292 = vweird.f32 %v2286
        %vm2293 = vmor %vm2291, %vm2292
        %v2294 = vsel %vm2293, %v2286, %v2290
        %v2295 = vand.u32 2147483647, %v2128
        %vm2296 = vcmp.eq.f32.partialorder %v2295, 8.507059e+37
        %v2297 = vand.u32 %v2128, 2147483648
        %v2298 = vor.u32 1.1754944e-38, %v2297
        %v2299 = vsel %vm2296, %v2298, %v2294
        %v2300 = vmul.f32 1.0, %v2299
        %v2301 = vrcp.pop %v2129
        %v2302 = vmul.f32 %v2129, %v2301
        %v2303 = vsub.f32 1.0, %v2302
        %v2304 = vmul.f32 %v2301, %v2303
        %v2305 = vadd.f32 %v2301, %v2304
        %vm2306 = vweird.f32 %v2129
        %vm2307 = vweird.f32 %v2301
        %vm2308 = vmor %vm2306, %vm2307
        %v2309 = vsel %vm2308, %v2301, %v2305
        %v2310 = vand.u32 2147483647, %v2129
        %vm2311 = vcmp.eq.f32.partialorder %v2310, 8.507059e+37
        %v2312 = vand.u32 %v2129, 2147483648
        %v2313 = vor.u32 1.1754944e-38, %v2312
        %v2314 = vsel %vm2311, %v2313, %v2309
        %v2315 = vmul.f32 1.0, %v2314
        %v2316 = vrcp.pop %v2130
        %v2317 = vmul.f32 %v2130, %v2316
        %v2318 = vsub.f32 1.0, %v2317
        %v2319 = vmul.f32 %v2316, %v2318
        %v2320 = vadd.f32 %v2316, %v2319
        %vm2321 = vweird.f32 %v2130
        %vm2322 = vweird.f32 %v2316
        %vm2323 = vmor %vm2321, %vm2322
        %v2324 = vsel %vm2323, %v2316, %v2320
        %v2325 = vand.u32 2147483647, %v2130
        %vm2326 = vcmp.eq.f32.partialorder %v2325, 8.507059e+37
        %v2327 = vand.u32 %v2130, 2147483648
        %v2328 = vor.u32 1.1754944e-38, %v2327
        %v2329 = vsel %vm2326, %v2328, %v2324
        %v2330 = vmul.f32 1.0, %v2329
        %v2331 = vrcp.pop %v2131
        %v2332 = vmul.f32 %v2131, %v2331
        %v2333 = vsub.f32 1.0, %v2332
        %v2334 = vmul.f32 %v2331, %v2333
        %v2335 = vadd.f32 %v2331, %v2334
        %vm2336 = vweird.f32 %v2131
        %vm2337 = vweird.f32 %v2331
        %vm2338 = vmor %vm2336, %vm2337
        %v2339 = vsel %vm2338, %v2331, %v2335
        %v2340 = vand.u32 2147483647, %v2131
        %vm2341 = vcmp.eq.f32.partialorder %v2340, 8.507059e+37
        %v2342 = vand.u32 %v2131, 2147483648
        %v2343 = vor.u32 1.1754944e-38, %v2342
        %v2344 = vsel %vm2341, %v2343, %v2339
        %v2345 = vmul.f32 1.0, %v2344
        %v2346 = vrcp.pop %v2132
        %v2347 = vmul.f32 %v2132, %v2346
        %v2348 = vsub.f32 1.0, %v2347
        %v2349 = vmul.f32 %v2346, %v2348
        %v2350 = vadd.f32 %v2346, %v2349
        %vm2351 = vweird.f32 %v2132
        %vm2352 = vweird.f32 %v2346
        %vm2353 = vmor %vm2351, %vm2352
        %v2354 = vsel %vm2353, %v2346, %v2350
        %v2355 = vand.u32 2147483647, %v2132
        %vm2356 = vcmp.eq.f32.partialorder %v2355, 8.507059e+37
        %v2357 = vand.u32 %v2132, 2147483648
        %v2358 = vor.u32 1.1754944e-38, %v2357
        %v2359 = vsel %vm2356, %v2358, %v2354
        %v2360 = vmul.f32 1.0, %v2359
        %v2361 = vrcp.pop %v2133
        %v2362 = vmul.f32 %v2133, %v2361
        %v2363 = vsub.f32 1.0, %v2362
        %v2364 = vmul.f32 %v2361, %v2363
        %v2365 = vadd.f32 %v2361, %v2364
        %vm2366 = vweird.f32 %v2133
        %vm2367 = vweird.f32 %v2361
        %vm2368 = vmor %vm2366, %vm2367
        %v2369 = vsel %vm2368, %v2361, %v2365
        %v2370 = vand.u32 2147483647, %v2133
        %vm2371 = vcmp.eq.f32.partialorder %v2370, 8.507059e+37
        %v2372 = vand.u32 %v2133, 2147483648
        %v2373 = vor.u32 1.1754944e-38, %v2372
        %v2374 = vsel %vm2371, %v2373, %v2369
        %v2375 = vmul.f32 1.0, %v2374
        %v2376 = vrcp.pop %v2134
        %v2377 = vmul.f32 %v2134, %v2376
        %v2378 = vsub.f32 1.0, %v2377
        %v2379 = vmul.f32 %v2376, %v2378
        %v2380 = vadd.f32 %v2376, %v2379
        %vm2381 = vweird.f32 %v2134
        %vm2382 = vweird.f32 %v2376
        %vm2383 = vmor %vm2381, %vm2382
        %v2384 = vsel %vm2383, %v2376, %v2380
        %v2385 = vand.u32 2147483647, %v2134
        %vm2386 = vcmp.eq.f32.partialorder %v2385, 8.507059e+37
        %v2387 = vand.u32 %v2134, 2147483648
        %v2388 = vor.u32 1.1754944e-38, %v2387
        %v2389 = vsel %vm2386, %v2388, %v2384
        %v2390 = vmul.f32 1.0, %v2389
        %v2391 = vrcp.pop %v2135
        %v2392 = vmul.f32 %v2135, %v2391
        %v2393 = vsub.f32 1.0, %v2392
        %v2394 = vmul.f32 %v2391, %v2393
        %v2395 = vadd.f32 %v2391, %v2394
        %vm2396 = vweird.f32 %v2135
        %vm2397 = vweird.f32 %v2391
        %vm2398 = vmor %vm2396, %vm2397
        %v2399 = vsel %vm2398, %v2391, %v2395
        %v2400 = vand.u32 2147483647, %v2135
        %vm2401 = vcmp.eq.f32.partialorder %v2400, 8.507059e+37
        %v2402 = vand.u32 %v2135, 2147483648
        %v2403 = vor.u32 1.1754944e-38, %v2402
        %v2404 = vsel %vm2401, %v2403, %v2399
        %v2405 = vmul.f32 1.0, %v2404
        %v2406 = vrcp.pop %v2136
        %v2407 = vmul.f32 %v2136, %v2406
        %v2408 = vsub.f32 1.0, %v2407
        %v2409 = vmul.f32 %v2406, %v2408
        %v2410 = vadd.f32 %v2406, %v2409
        %vm2411 = vweird.f32 %v2136
        %vm2412 = vweird.f32 %v2406
        %vm2413 = vmor %vm2411, %vm2412
        %v2414 = vsel %vm2413, %v2406, %v2410
        %v2415 = vand.u32 2147483647, %v2136
        %vm2416 = vcmp.eq.f32.partialorder %v2415, 8.507059e+37
        %v2417 = vand.u32 %v2136, 2147483648
        %v2418 = vor.u32 1.1754944e-38, %v2417
        %v2419 = vsel %vm2416, %v2418, %v2414
        %v2420 = vmul.f32 1.0, %v2419
        %v2421 = vrcp.pop %v2137
        %v2422 = vmul.f32 %v2137, %v2421
        %v2423 = vsub.f32 1.0, %v2422
        %v2424 = vmul.f32 %v2421, %v2423
        %v2425 = vadd.f32 %v2421, %v2424
        %vm2426 = vweird.f32 %v2137
        %vm2427 = vweird.f32 %v2421
        %vm2428 = vmor %vm2426, %vm2427
        %v2429 = vsel %vm2428, %v2421, %v2425
        %v2430 = vand.u32 2147483647, %v2137
        %vm2431 = vcmp.eq.f32.partialorder %v2430, 8.507059e+37
        %v2432 = vand.u32 %v2137, 2147483648
        %v2433 = vor.u32 1.1754944e-38, %v2432
        %v2434 = vsel %vm2431, %v2433, %v2429
        %v2435 = vmul.f32 1.0, %v2434
        %v2436 = vrcp.pop %v2138
        %v2437 = vmul.f32 %v2138, %v2436
        %v2438 = vsub.f32 1.0, %v2437
        %v2439 = vmul.f32 %v2436, %v2438
        %v2440 = vadd.f32 %v2436, %v2439
        %vm2441 = vweird.f32 %v2138
        %vm2442 = vweird.f32 %v2436
        %vm2443 = vmor %vm2441, %vm2442
        %v2444 = vsel %vm2443, %v2436, %v2440
        %v2445 = vand.u32 2147483647, %v2138
        %vm2446 = vcmp.eq.f32.partialorder %v2445, 8.507059e+37
        %v2447 = vand.u32 %v2138, 2147483648
        %v2448 = vor.u32 1.1754944e-38, %v2447
        %v2449 = vsel %vm2446, %v2448, %v2444
        %v2450 = vmul.f32 1.0, %v2449
        %v2451 = vrcp.pop %v2139
        %v2452 = vmul.f32 %v2139, %v2451
        %v2453 = vsub.f32 1.0, %v2452
        %v2454 = vmul.f32 %v2451, %v2453
        %v2455 = vadd.f32 %v2451, %v2454
        %vm2456 = vweird.f32 %v2139
        %vm2457 = vweird.f32 %v2451
        %vm2458 = vmor %vm2456, %vm2457
        %v2459 = vsel %vm2458, %v2451, %v2455
        %v2460 = vand.u32 2147483647, %v2139
        %vm2461 = vcmp.eq.f32.partialorder %v2460, 8.507059e+37
        %v2462 = vand.u32 %v2139, 2147483648
        %v2463 = vor.u32 1.1754944e-38, %v2462
        %v2464 = vsel %vm2461, %v2463, %v2459
        %v2465 = vmul.f32 1.0, %v2464
        %v2466 = vrcp.pop %v2140
        %v2467 = vmul.f32 %v2140, %v2466
        %v2468 = vsub.f32 1.0, %v2467
        %v2469 = vmul.f32 %v2466, %v2468
        %v2470 = vadd.f32 %v2466, %v2469
        %vm2471 = vweird.f32 %v2140
        %vm2472 = vweird.f32 %v2466
        %vm2473 = vmor %vm2471, %vm2472
        %v2474 = vsel %vm2473, %v2466, %v2470
        %v2475 = vand.u32 2147483647, %v2140
        %vm2476 = vcmp.eq.f32.partialorder %v2475, 8.507059e+37
        %v2477 = vand.u32 %v2140, 2147483648
        %v2478 = vor.u32 1.1754944e-38, %v2477
        %v2479 = vsel %vm2476, %v2478, %v2474
        %v2480 = vmul.f32 1.0, %v2479
        %v2481 = vrcp.pop %v2141
        %v2482 = vmul.f32 %v2141, %v2481
        %v2483 = vsub.f32 1.0, %v2482
        %v2484 = vmul.f32 %v2481, %v2483
        %v2485 = vadd.f32 %v2481, %v2484
        %vm2486 = vweird.f32 %v2141
        %vm2487 = vweird.f32 %v2481
        %vm2488 = vmor %vm2486, %vm2487
        %v2489 = vsel %vm2488, %v2481, %v2485
        %v2490 = vand.u32 2147483647, %v2141
        %vm2491 = vcmp.eq.f32.partialorder %v2490, 8.507059e+37
        %v2492 = vand.u32 %v2141, 2147483648
        %v2493 = vor.u32 1.1754944e-38, %v2492
        %v2494 = vsel %vm2491, %v2493, %v2489
        %v2495 = vmul.f32 1.0, %v2494
        %v2496 = vrcp.pop %v2142
        %v2497 = vmul.f32 %v2142, %v2496
        %v2498 = vsub.f32 1.0, %v2497
        %v2499 = vmul.f32 %v2496, %v2498
        %v2500 = vadd.f32 %v2496, %v2499
        %vm2501 = vweird.f32 %v2142
        %vm2502 = vweird.f32 %v2496
        %vm2503 = vmor %vm2501, %vm2502
        %v2504 = vsel %vm2503, %v2496, %v2500
        %v2505 = vand.u32 2147483647, %v2142
        %vm2506 = vcmp.eq.f32.partialorder %v2505, 8.507059e+37
        %v2507 = vand.u32 %v2142, 2147483648
        %v2508 = vor.u32 1.1754944e-38, %v2507
        %v2509 = vsel %vm2506, %v2508, %v2504
        %v2510 = vmul.f32 1.0, %v2509
        %v2511 = vrcp.pop %v2143
        %v2512 = vmul.f32 %v2143, %v2511
        %v2513 = vsub.f32 1.0, %v2512
        %v2514 = vmul.f32 %v2511, %v2513
        %v2515 = vadd.f32 %v2511, %v2514
        %vm2516 = vweird.f32 %v2143
        %vm2517 = vweird.f32 %v2511
        %vm2518 = vmor %vm2516, %vm2517
        %v2519 = vsel %vm2518, %v2511, %v2515
        %v2520 = vand.u32 2147483647, %v2143
        %vm2521 = vcmp.eq.f32.partialorder %v2520, 8.507059e+37
        %v2522 = vand.u32 %v2143, 2147483648
        %v2523 = vor.u32 1.1754944e-38, %v2522
        %v2524 = vsel %vm2521, %v2523, %v2519
        %v2525 = vmul.f32 1.0, %v2524
        %v2526 = vrcp.pop %v2144
        %v2527 = vmul.f32 %v2144, %v2526
        %v2528 = vsub.f32 1.0, %v2527
        %v2529 = vmul.f32 %v2526, %v2528
        %v2530 = vadd.f32 %v2526, %v2529
        %vm2531 = vweird.f32 %v2144
        %vm2532 = vweird.f32 %v2526
        %vm2533 = vmor %vm2531, %vm2532
        %v2534 = vsel %vm2533, %v2526, %v2530
        %v2535 = vand.u32 2147483647, %v2144
        %vm2536 = vcmp.eq.f32.partialorder %v2535, 8.507059e+37
        %v2537 = vand.u32 %v2144, 2147483648
        %v2538 = vor.u32 1.1754944e-38, %v2537
        %v2539 = vsel %vm2536, %v2538, %v2534
        %v2540 = vmul.f32 1.0, %v2539
        %v2541 = vrcp.pop %v2145
        %v2542 = vmul.f32 %v2145, %v2541
        %v2543 = vsub.f32 1.0, %v2542
        %v2544 = vmul.f32 %v2541, %v2543
        %v2545 = vadd.f32 %v2541, %v2544
        %vm2546 = vweird.f32 %v2145
        %vm2547 = vweird.f32 %v2541
        %vm2548 = vmor %vm2546, %vm2547
        %v2549 = vsel %vm2548, %v2541, %v2545
        %v2550 = vand.u32 2147483647, %v2145
        %vm2551 = vcmp.eq.f32.partialorder %v2550, 8.507059e+37
        %v2552 = vand.u32 %v2145, 2147483648
        %v2553 = vor.u32 1.1754944e-38, %v2552
        %v2554 = vsel %vm2551, %v2553, %v2549
        %v2555 = vmul.f32 1.0, %v2554
        %v2556 = vrcp.pop %v2146
        %v2557 = vmul.f32 %v2146, %v2556
        %v2558 = vsub.f32 1.0, %v2557
        %v2559 = vmul.f32 %v2556, %v2558
        %v2560 = vadd.f32 %v2556, %v2559
        %vm2561 = vweird.f32 %v2146
        %vm2562 = vweird.f32 %v2556
        %vm2563 = vmor %vm2561, %vm2562
        %v2564 = vsel %vm2563, %v2556, %v2560
        %v2565 = vand.u32 2147483647, %v2146
        %vm2566 = vcmp.eq.f32.partialorder %v2565, 8.507059e+37
        %v2567 = vand.u32 %v2146, 2147483648
        %v2568 = vor.u32 1.1754944e-38, %v2567
        %v2569 = vsel %vm2566, %v2568, %v2564
        %v2570 = vmul.f32 1.0, %v2569
        %v2571 = vrcp.pop %v2147
        %v2572 = vmul.f32 %v2147, %v2571
        %v2573 = vsub.f32 1.0, %v2572
        %v2574 = vmul.f32 %v2571, %v2573
        %v2575 = vadd.f32 %v2571, %v2574
        %vm2576 = vweird.f32 %v2147
        %vm2577 = vweird.f32 %v2571
        %vm2578 = vmor %vm2576, %vm2577
        %v2579 = vsel %vm2578, %v2571, %v2575
        %v2580 = vand.u32 2147483647, %v2147
        %vm2581 = vcmp.eq.f32.partialorder %v2580, 8.507059e+37
        %v2582 = vand.u32 %v2147, 2147483648
        %v2583 = vor.u32 1.1754944e-38, %v2582
        %v2584 = vsel %vm2581, %v2583, %v2579
        %v2585 = vmul.f32 1.0, %v2584
        %v2586 = vrcp.pop %v2148
        %v2587 = vmul.f32 %v2148, %v2586
        %v2588 = vsub.f32 1.0, %v2587
        %v2589 = vmul.f32 %v2586, %v2588
        %v2590 = vadd.f32 %v2586, %v2589
        %vm2591 = vweird.f32 %v2148
        %vm2592 = vweird.f32 %v2586
        %vm2593 = vmor %vm2591, %vm2592
        %v2594 = vsel %vm2593, %v2586, %v2590
        %v2595 = vand.u32 2147483647, %v2148
        %vm2596 = vcmp.eq.f32.partialorder %v2595, 8.507059e+37
        %v2597 = vand.u32 %v2148, 2147483648
        %v2598 = vor.u32 1.1754944e-38, %v2597
        %v2599 = vsel %vm2596, %v2598, %v2594
        %v2600 = vmul.f32 1.0, %v2599
        %v2601 = vrcp.pop %v2149
        %v2602 = vmul.f32 %v2149, %v2601
        %v2603 = vsub.f32 1.0, %v2602
        %v2604 = vmul.f32 %v2601, %v2603
        %v2605 = vadd.f32 %v2601, %v2604
        %vm2606 = vweird.f32 %v2149
        %vm2607 = vweird.f32 %v2601
        %vm2608 = vmor %vm2606, %vm2607
        %v2609 = vsel %vm2608, %v2601, %v2605
        %v2610 = vand.u32 2147483647, %v2149
        %vm2611 = vcmp.eq.f32.partialorder %v2610, 8.507059e+37
        %v2612 = vand.u32 %v2149, 2147483648
        %v2613 = vor.u32 1.1754944e-38, %v2612
        %v2614 = vsel %vm2611, %v2613, %v2609
        %v2615 = vmul.f32 1.0, %v2614
        %v2616 = vrcp.pop %v2150
        %v2617 = vmul.f32 %v2150, %v2616
        %v2618 = vsub.f32 1.0, %v2617
        %v2619 = vmul.f32 %v2616, %v2618
        %v2620 = vadd.f32 %v2616, %v2619
        %vm2621 = vweird.f32 %v2150
        %vm2622 = vweird.f32 %v2616
        %vm2623 = vmor %vm2621, %vm2622
        %v2624 = vsel %vm2623, %v2616, %v2620
        %v2625 = vand.u32 2147483647, %v2150
        %vm2626 = vcmp.eq.f32.partialorder %v2625, 8.507059e+37
        %v2627 = vand.u32 %v2150, 2147483648
        %v2628 = vor.u32 1.1754944e-38, %v2627
        %v2629 = vsel %vm2626, %v2628, %v2624
        %v2630 = vmul.f32 1.0, %v2629
        %2631 = vst [vmem:[%s436] sm:$0xff] 0.0
        %2632 = vst [vmem:[%s436 + $0x8] sm:$0xff] 0.0
        %2633 = vst [vmem:[%s436 + $0x10] sm:$0xff] 0.0
        %2634 = vst [vmem:[%s436 + $0x18] sm:$0xff] 0.0
        %2635 = vst [vmem:[%s436 + $0x20] sm:$0xff] 0.0
        %2636 = vst [vmem:[%s436 + $0x28] sm:$0xff] 0.0
        %2637 = vst [vmem:[%s436 + $0x30] sm:$0xff] 0.0
        %2638 = vst [vmem:[%s436 + $0x38] sm:$0xff] 0.0
        %2639 = vst [vmem:[%s436 + $0x40] sm:$0xff] 0.0
        %2640 = vst [vmem:[%s436 + $0x48] sm:$0xff] 0.0
        %2641 = vst [vmem:[%s436 + $0x50] sm:$0xff] 0.0
        %2642 = vst [vmem:[%s436 + $0x58] sm:$0xff] 0.0
        %2643 = vst [vmem:[%s436 + $0x60] sm:$0xff] 0.0
        %2644 = vst [vmem:[%s436 + $0x68] sm:$0xff] 0.0
        %2645 = vst [vmem:[%s436 + $0x70] sm:$0xff] 0.0
        %2646 = vst [vmem:[%s436 + $0x78] sm:$0xff] 0.0
        %vm2647 = vcmask 31744
        %2648 = vst.msk [vmem:[%s436] sm:$0xff] %vm2647, %v887
        %2649 = vst.msk [vmem:[%s436 + $0x8] sm:$0xff] %vm2647, %v889
        %2650 = vst.msk [vmem:[%s436 + $0x10] sm:$0xff] %vm2647, %v892
        %2651 = vst.msk [vmem:[%s436 + $0x18] sm:$0xff] %vm2647, %v894
        %2652 = vst.msk [vmem:[%s436 + $0x20] sm:$0xff] %vm2647, %v897
        %2653 = vst.msk [vmem:[%s436 + $0x28] sm:$0xff] %vm2647, %v899
        %2654 = vst.msk [vmem:[%s436 + $0x30] sm:$0xff] %vm2647, %v902
        %2655 = vst.msk [vmem:[%s436 + $0x38] sm:$0xff] %vm2647, %v904
        %2656 = vst.msk [vmem:[%s436 + $0x40] sm:$0xff] %vm2647, %v907
        %2657 = vst.msk [vmem:[%s436 + $0x48] sm:$0xff] %vm2647, %v909
        %2658 = vst.msk [vmem:[%s436 + $0x50] sm:$0xff] %vm2647, %v912
        %2659 = vst.msk [vmem:[%s436 + $0x58] sm:$0xff] %vm2647, %v914
        %2660 = vst.msk [vmem:[%s436 + $0x60] sm:$0xff] %vm2647, %v917
        %2661 = vst.msk [vmem:[%s436 + $0x68] sm:$0xff] %vm2647, %v919
        %2662 = vst.msk [vmem:[%s436 + $0x70] sm:$0xff] %vm2647, %v922
        %2663 = vst.msk [vmem:[%s436 + $0x78] sm:$0xff] %vm2647, %v924
        %vm2664 = vcmask 64544
        %2665 = vst.msk [vmem:[%s436] sm:$0xff] %vm2664, %v1198
        %2666 = vst.msk [vmem:[%s436 + $0x8] sm:$0xff] %vm2664, %v1199
        %2667 = vst.msk [vmem:[%s436 + $0x10] sm:$0xff] %vm2664, %v1200
        %2668 = vst.msk [vmem:[%s436 + $0x18] sm:$0xff] %vm2664, %v1201
        %2669 = vst.msk [vmem:[%s436 + $0x20] sm:$0xff] %vm2664, %v1202
        %2670 = vst.msk [vmem:[%s436 + $0x28] sm:$0xff] %vm2664, %v1203
        %2671 = vst.msk [vmem:[%s436 + $0x30] sm:$0xff] %vm2664, %v1204
        %2672 = vst.msk [vmem:[%s436 + $0x38] sm:$0xff] %vm2664, %v1205
        %2673 = vst.msk [vmem:[%s436 + $0x40] sm:$0xff] %vm2664, %v1206
        %2674 = vst.msk [vmem:[%s436 + $0x48] sm:$0xff] %vm2664, %v1207
        %2675 = vst.msk [vmem:[%s436 + $0x50] sm:$0xff] %vm2664, %v1208
        %2676 = vst.msk [vmem:[%s436 + $0x58] sm:$0xff] %vm2664, %v1209
        %2677 = vst.msk [vmem:[%s436 + $0x60] sm:$0xff] %vm2664, %v1210
        %2678 = vst.msk [vmem:[%s436 + $0x68] sm:$0xff] %vm2664, %v1211
        %2679 = vst.msk [vmem:[%s436 + $0x70] sm:$0xff] %vm2664, %v1212
        %2680 = vst.msk [vmem:[%s436 + $0x78] sm:$0xff] %vm2664, %v1213
        %2681 = vst [vmem:[%s443] sm:$0xff] %v2165
        %2682 = vst [vmem:[%s443 + $0x8] sm:$0xff] %v2180
        %2683 = vst [vmem:[%s443 + $0x10] sm:$0xff] %v2195
        %2684 = vst [vmem:[%s443 + $0x18] sm:$0xff] %v2210
        %2685 = vst [vmem:[%s443 + $0x20] sm:$0xff] %v2225
        %2686 = vst [vmem:[%s443 + $0x28] sm:$0xff] %v2240
        %2687 = vst [vmem:[%s443 + $0x30] sm:$0xff] %v2255
        %2688 = vst [vmem:[%s443 + $0x38] sm:$0xff] %v2270
        %2689 = vst [vmem:[%s443 + $0x40] sm:$0xff] %v2285
        %2690 = vst [vmem:[%s443 + $0x48] sm:$0xff] %v2300
        %2691 = vst [vmem:[%s443 + $0x50] sm:$0xff] %v2315
        %2692 = vst [vmem:[%s443 + $0x58] sm:$0xff] %v2330
        %2693 = vst [vmem:[%s443 + $0x60] sm:$0xff] %v2345
        %2694 = vst [vmem:[%s443 + $0x68] sm:$0xff] %v2360
        %2695 = vst [vmem:[%s443 + $0x70] sm:$0xff] %v2375
        %2696 = vst [vmem:[%s443 + $0x78] sm:$0xff] %v2390
        %2697 = vst [vmem:[%s443 + $0x80] sm:$0xff] %v2405
        %2698 = vst [vmem:[%s443 + $0x88] sm:$0xff] %v2420
        %2699 = vst [vmem:[%s443 + $0x90] sm:$0xff] %v2435
        %2700 = vst [vmem:[%s443 + $0x98] sm:$0xff] %v2450
        %2701 = vst [vmem:[%s443 + $0xa0] sm:$0xff] %v2465
        %2702 = vst [vmem:[%s443 + $0xa8] sm:$0xff] %v2480
        %2703 = vst [vmem:[%s443 + $0xb0] sm:$0xff] %v2495
        %2704 = vst [vmem:[%s443 + $0xb8] sm:$0xff] %v2510
        %2705 = vst [vmem:[%s443 + $0xc0] sm:$0xff] %v2525
        %2706 = vst [vmem:[%s443 + $0xc8] sm:$0xff] %v2540
        %2707 = vst [vmem:[%s443 + $0xd0] sm:$0xff] %v2555
        %2708 = vst [vmem:[%s443 + $0xd8] sm:$0xff] %v2570
        %2709 = vst [vmem:[%s443 + $0xe0] sm:$0xff] %v2585
        %2710 = vst [vmem:[%s443 + $0xe8] sm:$0xff] %v2600
        %2711 = vst [vmem:[%s443 + $0xf0] sm:$0xff] %v2615
        %2712 = vst [vmem:[%s443 + $0xf8] sm:$0xff] %v2630
        %s2713 = sand.u32 %s259, 1
        %s2714 = scalar_lea.sflag [#allocation4], %s2713
        %s2715 = sand.u32 %s259, 1
        %s2716 = smul.addr %s2715, 128
        %s2717 = scalar_lea.vmem [#allocation7], %s2716
        %s2718 = sand.u32 %s285, 1
        %s2719 = scalar_lea.sflag [#allocation9], %s2718
        %s2720 = sand.u32 %s285, 1
        %s2721 = smul.addr %s2720, 256
        %s2722 = scalar_lea.vmem [#allocation8], %s2721
        // Predicated region
        $region69: #{tpu_custom_call.1} parent=59 // pred_check
          %p2723 = pneg %p269
        $region70: #{tpu_custom_call.1} parent=59 // pred_check_branch
          %2725 = sbr.rel (%p2723) target = $region72
        $region71: #{tpu_custom_call.1} parent=59 // pred_region
          %s2726 = smul.u32 16, %s31
          %2728 = vsyncadd %s2714, 0
          %s2729 = smul.addr %s2726, 8
          %s2730 = scalar_lea.hbm %s10, %s2729
          %s2731 = sshll.u32 %s2717, 4
          %s2732 = int_to_ptr.vmem [resolvable:$true] %s2731
          %s2733 = sshll.u32 %s2730, 4
          %s2734 = int_to_ptr.hbm [resolvable:$true] %s2733
          %2739 = dma.vmem_to_hbm [thread:$0]  %s2732, 2048, %s2734, %s2714, 128, 128, 8
        $region72: #{tpu_custom_call.1} parent=59 // pred_fallthru
          _
        // Predicated region
        $region73: #{tpu_custom_call.1} parent=59 // pred_check
          %p2740 = pneg %p295
        $region74: #{tpu_custom_call.1} parent=59 // pred_check_branch
          %2742 = sbr.rel (%p2740) target = $region76
        $region75: #{tpu_custom_call.1} parent=59 // pred_region
          %s2743 = smul.u32 16, %s31
          %2745 = vsyncadd %s2719, 0
          %s2746 = smul.addr %s2743, 2
          %s2747 = smul.addr %s2746, 8
          %s2748 = scalar_lea.hbm %s11, %s2747
          %s2749 = sshll.u32 %s2722, 4
          %s2750 = int_to_ptr.vmem [resolvable:$true] %s2749
          %s2751 = sshll.u32 %s2748, 4
          %s2752 = int_to_ptr.hbm [resolvable:$true] %s2751
          %2757 = dma.vmem_to_hbm [thread:$0]  %s2750, 4096, %s2752, %s2719, 256, 256, 16
        $region76: #{tpu_custom_call.1} parent=59 // pred_fallthru
          _
      $region60: #{tpu_custom_call.1} parent=5 // pred_fallthru
        _
      %p2758 = scmp.le.s32.totalorder 2, %s26
      // Predicated region
      $region77: #{tpu_custom_call.1} parent=5 // pred_check
        %p2759 = pneg %p2758
      $region78: #{tpu_custom_call.1} parent=5 // pred_check_branch
        %2761 = sbr.rel (%p2759) target = $region80
      $region79: #{tpu_custom_call.1} parent=5 // pred_region
        %s2762 = ssub.s32 %s26, 2
        // Predicated region
        $region81: #{tpu_custom_call.1} parent=79 // pred_check
          %p2763 = pneg %p275
        $region82: #{tpu_custom_call.1} parent=79 // pred_check_branch
          %2765 = sbr.rel (%p2763) target = $region84
        $region83: #{tpu_custom_call.1} parent=79 // pred_region
          %s2766 = sand.u32 %s260, 1
          %s2767 = scalar_lea.sflag [#allocation4], %s2766
          %s2768 = sand.u32 %s260, 1
          %s2769 = smul.addr %s2768, 128
          %s2770 = scalar_lea.vmem [#allocation7], %s2769
          %2772 = dma.done %s2767, 2048
        $region84: #{tpu_custom_call.1} parent=79 // pred_fallthru
          _
        // Predicated region
        $region85: #{tpu_custom_call.1} parent=79 // pred_check
          %p2773 = pneg %p301
        $region86: #{tpu_custom_call.1} parent=79 // pred_check_branch
          %2775 = sbr.rel (%p2773) target = $region88
        $region87: #{tpu_custom_call.1} parent=79 // pred_region
          %s2776 = sand.u32 %s286, 1
          %s2777 = scalar_lea.sflag [#allocation9], %s2776
          %s2778 = sand.u32 %s286, 1
          %s2779 = smul.addr %s2778, 256
          %s2780 = scalar_lea.vmem [#allocation8], %s2779
          %2782 = dma.done %s2777, 4096
        $region88: #{tpu_custom_call.1} parent=79 // pred_fallthru
          _
      $region80: #{tpu_custom_call.1} parent=5 // pred_fallthru
        _
    $region6: #{tpu_custom_call.1} parent=1 // loop_footer
      %s30 = sadd.s32 1, %s26
    $region7: #{tpu_custom_call.1} parent=1 // loop_footer_branch
      %25 = sbr.rel target = $region3
    $region8: #{tpu_custom_call.1} parent=1 // loop_exit
      _
    %2783 = vsyncpa [#allocation3], 1
    %s2784 = scalar_lea.sflag [#allocation3], 1
    %2785 = vsyncpa %s2784, 1
    %2786 = vsyncpa [#allocation6], 1
    %2787 = vsyncpa [#allocation4], 1
    %s2788 = scalar_lea.sflag [#allocation4], 1
    %2789 = vsyncpa %s2788, 1
    %2790 = vsyncpa [#allocation9], 1
    %s2791 = scalar_lea.sflag [#allocation9], 1
    %2792 = vsyncpa %s2791, 1

</llo_original>
